<compile_context>
chip_gen: v6e
topology: v6e:2x2x1
jax: 0.10.0
libtpu: 0.0.40
codegen_flags: <defaults>
</compile_context>

<pallas_src>
import functools

import jax
import jax.numpy as jnp
import numpy as np
from jax.experimental import pallas as pl
from jax.experimental.pallas import tpu as pltpu


_PAD_SENTINEL = -2  # packed-index value for padded (fake) samples


def _pick_tile_n(N, max_tile):
    """Sample-axis tile (multiple of 128) and padded N (multiple of tile)."""
    n128 = ((N + 127) // 128) * 128
    k = -(-n128 // max_tile)                 # number of tiles
    tn = 128 * (-(-n128 // (128 * k)))       # smallest mult-of-128 tile
    return tn, k * tn


def _conf_guide_kernel(tm_ref, fused_ref, out_ref,
                       s_ad, s_m, s_cd, s_cm, s_pd, s_pc,
                       *, H, W, B, flat):
    """One grid step = one prediction p x one N-tile.

    tm_ref    : flat -> [B, 2, H*W] f32 (row 0 = GT depth, row 1 = mask)
                else -> [B, 2H, W]  f32 (rows 0..H-1 depth, H..2H-1 mask)
    fused_ref : [1, 3, B, tn] f32; ch0 = pred depth, ch1 = pred conf,
                ch2 = bitcast(int32 packed index iy*65536+ix; -1 OOB, -2 pad)
    out_ref   : [1, 1, 8] f32 lanes:
                [sum|pd-gt|*m, sum m, sum|pc-gtc|*cm, sum cm, sum pd, sum pc, 0, 0]
    s_*       : [B, tn] f32 VMEM accumulators (live across the N-tile axis)
    """
    nt = pl.program_id(1)

    @pl.when(nt == 0)
    def _():
        for s in (s_ad, s_m, s_cd, s_cm, s_pd, s_pc):
            s[...] = jnp.zeros_like(s)

    tn = fused_ref.shape[-1]
    pd = fused_ref[0, 0]                                    # [B, tn]
    pc = fused_ref[0, 1]                                    # [B, tn]
    packed = pltpu.bitcast(fused_ref[0, 2], jnp.int32)      # [B, tn]

    is_pad = packed == _PAD_SENTINEL
    iy = packed >> 16                                       # arithmetic shift
    ix = packed & 0xFFFF

    gt_rows, gm_rows = [], []
    if flat:
        # Flattened gather: K = H*W fills the MXU; one matmul per batch
        # fetches depth and mask rows together.  OOB/pad decode to an index
        # >= 65534 - W > H*W, so the one-hot has no hit -> gather gives 0
        # (== grid_sample padding_mode='zeros').
        lin = iy * W + ix
        iota_hw = jax.lax.broadcasted_iota(jnp.int32, (H * W, tn), 0)
        for b in range(B):
            oh = (iota_hw == lin[b:b + 1, :]).astype(jnp.float32)   # [HW, tn]
            g = jnp.dot(tm_ref[b], oh,
                        preferred_element_type=jnp.float32)          # [2, tn]
            gt_rows.append(g[0:1, :])
            gm_rows.append(g[1:2, :])
    else:
        # Factorized fallback for large H*W: columns via MXU, rows via VPU/XLU.
        iota_w = jax.lax.broadcasted_iota(jnp.int32, (W, tn), 0)
        iota_h = jax.lax.broadcasted_iota(jnp.int32, (H, tn), 0)
        for b in range(B):
            ohx = (iota_w == ix[b:b + 1, :]).astype(jnp.float32)     # [W, tn]
            ohy = (iota_h == iy[b:b + 1, :]).astype(jnp.float32)     # [H, tn]
            g = jnp.dot(tm_ref[b], ohx,
                        preferred_element_type=jnp.float32)          # [2H, tn]
            gt_rows.append(jnp.sum(ohy * g[:H, :], axis=0, keepdims=True))
            gm_rows.append(jnp.sum(ohy * g[H:, :], axis=0, keepdims=True))

    gt = jnp.concatenate(gt_rows, axis=0)                   # [B, tn]
    gm = jnp.concatenate(gm_rows, axis=0)                   # [B, tn]

    # Full-sublane elementwise chain on [B, tn].
    gm_b = gm > 0.5
    gm_f = gm_b.astype(jnp.float32)
    ad = jnp.abs(pd - gt)
    cm_b = (ad < gt) & gm_b
    cm_f = cm_b.astype(jnp.float32)
    # TODO(synk): the division below is intentionally unguarded to mirror the
    # PyTorch module: any real sample with gt == 0 (out-of-bounds coord or a
    # zero target) makes the whole confidence term NaN, which the wrapper's
    # isnan/isinf guard then zeroes for that prediction.  Padded samples are
    # excluded via is_pad so padding can never leak NaN into the sums.
    gt_conf = (1.0 - ad / jnp.abs(gt)) * cm_f
    cdiff = jnp.abs(pc - gt_conf) * cm_f
    cdiff = jnp.where(is_pad, 0.0, cdiff)

    s_ad[...] += ad * gm_f
    s_m[...] += gm_f
    s_cd[...] += cdiff
    s_cm[...] += cm_f
    s_pd[...] += pd
    s_pc[...] += pc

    @pl.when(nt == pl.num_programs(1) - 1)
    def _():
        vals = (jnp.sum(s_ad[...]), jnp.sum(s_m[...]),
                jnp.sum(s_cd[...]), jnp.sum(s_cm[...]),
                jnp.sum(s_pd[...]), jnp.sum(s_pc[...]))
        lane = jax.lax.broadcasted_iota(jnp.int32, (1, 1, 8), 2)
        acc = jnp.zeros((1, 1, 8), jnp.float32)
        for i, v in enumerate(vals):
            acc = jnp.where(lane == i, v, acc)
        out_ref[...] = acc


def _partial_sums(tm_in, fused, H, W, B, tn, flat, vmem_limit):
    """Returns [P, 1, 8] partial sums for all predictions in one pallas_call."""
    P = fused.shape[0]
    n_pad = fused.shape[-1]
    grid = (P, n_pad // tn)
    kernel = functools.partial(_conf_guide_kernel, H=H, W=W, B=B, flat=flat)
    return pl.pallas_call(
        kernel,
        out_shape=jax.ShapeDtypeStruct((P, 1, 8), jnp.float32),
        grid_spec=pltpu.PrefetchScalarGridSpec(
            num_scalar_prefetch=0,
            grid=grid,
            in_specs=[
                # target+mask slab: constant block index -> fetched once and
                # VMEM-resident for the whole grid.
                pl.BlockSpec(tm_in.shape, lambda p, n: (0, 0, 0)),
                # fused per-prediction slab: one DMA per grid step.
                pl.BlockSpec((1, 3, B, tn), lambda p, n: (p, 0, 0, n)),
            ],
            out_specs=pl.BlockSpec((1, 1, 8), lambda p, n: (p, 0, 0)),
            scratch_shapes=[pltpu.VMEM((B, tn), jnp.float32)
                            for _ in range(6)],
        ),
        compiler_params=pltpu.CompilerParams(
            dimension_semantics=("parallel", "arbitrary"),
            vmem_limit_bytes=vmem_limit),
    )(tm_in, fused)


def confidence_guide_loss(samples_pred_list, target, coord_list, mask,
                          loss_weight=1.0, loss_gamma=0.9, conf_loss=True,
                          eps=1e-6, gather_mode="auto", max_tile_n=2048):
    """JAX/Pallas equivalent of ConfidenceGuideLoss.forward."""
    B, _, H, W = target.shape
    P = len(samples_pred_list)
    N = samples_pred_list[0].shape[-1]
    hw = H * W

    if gather_mode == "auto":
        flat = hw <= 2048
    else:
        flat = gather_mode == "flat"

    # ---- target / mask slab (stays VMEM-resident inside the kernel) ----
    t2 = target[:, 0, :, :].astype(jnp.float32)               # [B, H, W]
    m2 = mask.astype(jnp.float32)[:, 0, :, :]                 # [B, H, W]
    if flat:
        tm_in = jnp.stack([t2.reshape(B, hw), m2.reshape(B, hw)],
                          axis=1)                             # [B, 2, HW]
    else:
        tm_in = jnp.concatenate([t2, m2], axis=1)             # [B, 2H, W]
        # TODO(synk): for production image sizes the resident [B,2H,W] slab may
        # not fit v7x's 64 MiB VMEM; that would need an H-tiling grid axis or
        # manual DMA paging of the target, which is not implemented here.

    # ---- nearest-neighbour pixel indices, packed to one int32 per sample ----
    # Mirrors F.grid_sample(mode='nearest', align_corners=True, padding='zeros')
    coord_all = jnp.stack([c.astype(jnp.float32) for c in coord_list], axis=0)
    x = coord_all[:, :, 0, :, 0]                              # [P, B, N]
    y = coord_all[:, :, 0, :, 1]
    fx = jnp.round((x + 1.0) * 0.5 * (W - 1))
    fy = jnp.round((y + 1.0) * 0.5 * (H - 1))
    inb = (fx >= 0) & (fx <= W - 1) & (fy >= 0) & (fy <= H - 1)
    ix = jnp.clip(fx, 0, W - 1).astype(jnp.int32)
    iy = jnp.clip(fy, 0, H - 1).astype(jnp.int32)
    packed = jnp.where(inb, iy * 65536 + ix, -1)              # [P, B, N] i32

    # ---- N tiling / padding ----
    max_tile = max(128, (int(max_tile_n) // 128) * 128)
    if flat:
        # keep the in-kernel (HW, tn) one-hot intermediate to a few MiB
        cap = max(128, ((2 * 1024 * 1024) // (4 * hw)) // 128 * 128)
        max_tile = min(max_tile, cap)
    tn, n_pad = _pick_tile_n(N, max_tile)

    # ---- fused per-prediction slab: [P, 3, B, n_pad] ----
    pred_all = jnp.stack([p.astype(jnp.float32) for p in samples_pred_list],
                         axis=0)                              # [P, B, 2, N]
    pdpc = jnp.transpose(pred_all, (0, 2, 1, 3))              # [P, 2, B, N]
    if n_pad > N:
        pdpc = jnp.pad(pdpc, ((0, 0), (0, 0), (0, 0), (0, n_pad - N)))
        packed = jnp.pad(packed, ((0, 0), (0, 0), (0, n_pad - N)),
                         constant_values=_PAD_SENTINEL)
    packed_f = jax.lax.bitcast_convert_type(packed, jnp.float32)
    fused = jnp.concatenate([pdpc, packed_f[:, None, :, :]], axis=1)

    # ---- VMEM budget: derived from shapes, capped under v7x's 64 MiB ----
    ceil8 = lambda v: ((v + 7) // 8) * 8
    tile_buf = 3 * ceil8(B) * tn * 4                 # one fused input buffer
    scratch = 6 * ceil8(B) * tn * 4                  # vector accumulators
    tm_res = tm_in.shape[0] * ceil8(tm_in.shape[1]) * max(128, tm_in.shape[2]) * 4
    oh_tmp = 3 * ceil8(hw if flat else 2 * H) * tn * 4
    need = 2 * tile_buf + scratch + 2 * tm_res + oh_tmp + (2 << 20)
    vmem_limit = int(min(max(2 * need, 32 * 1024 * 1024), 48 * 1024 * 1024))

    sums = _partial_sums(tm_in, fused, H, W, B, tn, flat, vmem_limit)[:, 0, :]
    sd, sm = sums[:, 0], sums[:, 1]
    scd, scm = sums[:, 2], sums[:, 3]
    spd, spc = sums[:, 4], sums[:, 5]

    n_predictions = P
    adjusted_loss_gamma = loss_gamma ** (15.0 / (n_predictions - 1))
    i_weights = jnp.asarray(
        np.array([adjusted_loss_gamma ** (n_predictions - i - 1)
                  for i in range(n_predictions)], dtype=np.float32))

    curr = sd / (sm + eps)
    # mirrors: if isnan|isinf: curr_loss = 0 * sum(pred_depth)
    # TODO(synk): the PyTorch module also print()s on this branch; the
    # host-side print (driven by .item()) has no in-graph equivalent and is
    # omitted.  sum(pd)/sum(pc) come from the kernel, so no extra HBM pass.
    curr = jnp.where(jnp.isnan(curr) | jnp.isinf(curr), 0.0 * spd, curr)

    if conf_loss:
        cl = scd / (scm + eps)
        cl = jnp.where(jnp.isnan(cl) | jnp.isinf(cl), 0.0 * spc, cl)
    else:
        cl = jnp.zeros_like(curr)

    return jnp.sum((cl + curr) * i_weights) * loss_weight


# ----------------------- pure-JAX reference (for checking) ------------------
def _grid_sample_nearest_ref(img_flat, coord_xy, H, W):
    x = coord_xy[:, 0, :]
    y = coord_xy[:, 1, :]
    ix = jnp.round((x + 1.0) * 0.5 * (W - 1))
    iy = jnp.round((y + 1.0) * 0.5 * (H - 1))
    inb = (ix >= 0) & (ix <= W - 1) & (iy >= 0) & (iy <= H - 1)
    lin = jnp.clip((iy * W + ix).astype(jnp.int32), 0, H * W - 1)
    g = jnp.take_along_axis(img_flat, lin, axis=1)
    return g * inb.astype(img_flat.dtype)


def confidence_guide_loss_ref(samples_pred_list, target, coord_list, mask,
                              loss_weight=1.0, loss_gamma=0.9, eps=1e-6):
    B, _, H, W = target.shape
    tf = target[:, 0, :, :].reshape(B, H * W).astype(jnp.float32)
    mf = mask.astype(jnp.float32)[:, 0, :, :].reshape(B, H * W)
    n = len(samples_pred_list)
    agamma = loss_gamma ** (15.0 / (n - 1))
    loss = jnp.float32(0.0)
    for i, (pred, coord) in enumerate(zip(samples_pred_list, coord_list)):
        pred = pred.astype(jnp.float32)
        cxy = jnp.transpose(coord[:, 0, :, :], (0, 2, 1)).astype(jnp.float32)
        gt = _grid_sample_nearest_ref(tf, cxy, H, W)[:, None, :]        # [B,1,N]
        gm = _grid_sample_nearest_ref(mf, cxy, H, W)[:, None, :] > 0.5  # [B,1,N]
        pd, pc = pred[:, :1, :], pred[:, 1:, :]
        iw = agamma ** (n - i - 1)
        diff = jnp.abs(pd - gt) * gm
        curr = jnp.sum(diff) / (jnp.sum(gm) + eps)
        curr = jnp.where(jnp.isnan(curr) | jnp.isinf(curr),
                         0.0 * jnp.sum(pd), curr)
        cm = (jnp.abs(gt - pd) < gt) & gm
        gtc = (1.0 - jnp.abs((pd - gt) / gt)) * cm
        cl = jnp.sum(jnp.abs(pc - gtc) * cm) / (jnp.sum(cm) + eps)
        cl = jnp.where(jnp.isnan(cl) | jnp.isinf(cl), 0.0 * jnp.sum(pc), cl)
        loss = loss + (cl + curr) * iw
    return loss * loss_weight


if __name__ == "__main__":
    key = jax.random.PRNGKey(0)
    B, H, W = 2, 16, 16

    def make_case(case_key, n_pred, N, coord_range):
        keys = jax.random.split(case_key, 2 + 3 * n_pred)
        target = jax.random.uniform(keys[0], (B, 1, H, W), jnp.float32,
                                    minval=0.5, maxval=10.0)
        mask = jax.random.uniform(keys[1], (B, 1, H, W), jnp.float32) > 0.3
        preds, coords = [], []
        for i in range(n_pred):
            kd, kc, kg = keys[2 + 3 * i], keys[3 + 3 * i], keys[4 + 3 * i]
            depth = jax.random.uniform(kd, (B, 1, N), jnp.float32,
                                       minval=0.5, maxval=10.0)
            conf = jax.random.uniform(kc, (B, 1, N), jnp.float32)
            preds.append(jnp.concatenate([depth, conf], axis=1))
            coords.append(jax.random.uniform(kg, (B, 1, N, 2), jnp.float32,
                                             minval=-coord_range,
                                             maxval=coord_range))
        return preds, target, coords, mask

    k1, k2 = jax.random.split(key)

    # Case 1: flattened one-hot gather (small H*W), single big N tile.
    preds, target, coords, mask = make_case(k1, n_pred=4, N=512,
                                            coord_range=1.0)
    out = jax.block_until_ready(
        confidence_guide_loss(preds, target, coords, mask,
                              gather_mode="auto"))
    ref = jax.block_until_ready(
        confidence_guide_loss_ref(preds, target, coords, mask))
    np.testing.assert_allclose(np.asarray(out), np.asarray(ref),
                               rtol=1e-4, atol=1e-5)

    # Case 2: factorized gather fallback, multiple N tiles, N padding
    # (640 -> 768) and some out-of-bounds coords (exercises the zeros-padding
    # gather and the NaN guard on the confidence term).
    preds2, target2, coords2, mask2 = make_case(k2, n_pred=3, N=640,
                                                coord_range=1.15)
    out2 = jax.block_until_ready(
        confidence_guide_loss(preds2, target2, coords2, mask2,
                              gather_mode="factorized", max_tile_n=256))
    ref2 = jax.block_until_ready(
        confidence_guide_loss_ref(preds2, target2, coords2, mask2))
    np.testing.assert_allclose(np.asarray(out2), np.asarray(ref2),
                               rtol=1e-4, atol=1e-5)

    print("KERNEL_OK")
</pallas_src>

<mosaic_0001>
module attributes {stable_mosaic.version = 11 : i64} {
  func.func @_conf_guide_kernel(%arg0: i32, %arg1: i32, %arg2: memref<2x2x256xf32, #tpu.memory_space<vmem>>, %arg3: memref<1x3x2x512xf32, #tpu.memory_space<vmem>>, %arg4: memref<1x1x8xf32, #tpu.memory_space<vmem>>, %arg5: memref<2x512xf32, #tpu.memory_space<vmem>>, %arg6: memref<2x512xf32, #tpu.memory_space<vmem>>, %arg7: memref<2x512xf32, #tpu.memory_space<vmem>>, %arg8: memref<2x512xf32, #tpu.memory_space<vmem>>, %arg9: memref<2x512xf32, #tpu.memory_space<vmem>>, %arg10: memref<2x512xf32, #tpu.memory_space<vmem>>) attributes {dimension_semantics = [#tpu.dimension_semantics<parallel>, #tpu.dimension_semantics<arbitrary>], iteration_bounds = array<i64: 4, 1>, scalar_prefetch = 0 : i64, scratch_operands = 6 : i64, tpu.core_type = #tpu.core_type<tc>, window_params = [{pipeline_mode = #tpu.pipeline_mode<synchronous>, transform_indices = @transform_0, window_bounds = array<i64: 2, 2, 256>}, {transform_indices = @transform_1, window_bounds = array<i64: 1, 3, 2, 512>}, {transform_indices = @transform_2, window_bounds = array<i64: 1, 1, 8>}]} {
    %c0_i32 = arith.constant 0 : i32
    %0 = arith.cmpi eq, %arg1, %c0_i32 : i32
    %1 = arith.extui %0 : i1 to i32
    %c0_i32_0 = arith.constant 0 : i32
    %2 = arith.cmpi ne, %1, %c0_i32_0 : i32
    scf.if %2 {
      %cst_47 = arith.constant 0.000000e+00 : f32
      %84 = vector.broadcast %cst_47 : f32 to vector<2x512xf32>
      %c0_48 = arith.constant 0 : index
      %c0_49 = arith.constant 0 : index
      %85 = vector.load %arg5[%c0_48, %c0_49] : memref<2x512xf32, #tpu.memory_space<vmem>>, vector<2x512xf32>
      tpu.vector_store %arg5[%c0_48, %c0_49], %84 {strides = array<i32>} : memref<2x512xf32, #tpu.memory_space<vmem>>, vector<2x512xf32>,
      %cst_50 = arith.constant 0.000000e+00 : f32
      %86 = vector.broadcast %cst_50 : f32 to vector<2x512xf32>
      %c0_51 = arith.constant 0 : index
      %c0_52 = arith.constant 0 : index
      %87 = vector.load %arg6[%c0_51, %c0_52] : memref<2x512xf32, #tpu.memory_space<vmem>>, vector<2x512xf32>
      tpu.vector_store %arg6[%c0_51, %c0_52], %86 {strides = array<i32>} : memref<2x512xf32, #tpu.memory_space<vmem>>, vector<2x512xf32>,
      %cst_53 = arith.constant 0.000000e+00 : f32
      %88 = vector.broadcast %cst_53 : f32 to vector<2x512xf32>
      %c0_54 = arith.constant 0 : index
      %c0_55 = arith.constant 0 : index
      %89 = vector.load %arg7[%c0_54, %c0_55] : memref<2x512xf32, #tpu.memory_space<vmem>>, vector<2x512xf32>
      tpu.vector_store %arg7[%c0_54, %c0_55], %88 {strides = array<i32>} : memref<2x512xf32, #tpu.memory_space<vmem>>, vector<2x512xf32>,
      %cst_56 = arith.constant 0.000000e+00 : f32
      %90 = vector.broadcast %cst_56 : f32 to vector<2x512xf32>
      %c0_57 = arith.constant 0 : index
      %c0_58 = arith.constant 0 : index
      %91 = vector.load %arg8[%c0_57, %c0_58] : memref<2x512xf32, #tpu.memory_space<vmem>>, vector<2x512xf32>
      tpu.vector_store %arg8[%c0_57, %c0_58], %90 {strides = array<i32>} : memref<2x512xf32, #tpu.memory_space<vmem>>, vector<2x512xf32>,
      %cst_59 = arith.constant 0.000000e+00 : f32
      %92 = vector.broadcast %cst_59 : f32 to vector<2x512xf32>
      %c0_60 = arith.constant 0 : index
      %c0_61 = arith.constant 0 : index
      %93 = vector.load %arg9[%c0_60, %c0_61] : memref<2x512xf32, #tpu.memory_space<vmem>>, vector<2x512xf32>
      tpu.vector_store %arg9[%c0_60, %c0_61], %92 {strides = array<i32>} : memref<2x512xf32, #tpu.memory_space<vmem>>, vector<2x512xf32>,
      %cst_62 = arith.constant 0.000000e+00 : f32
      %94 = vector.broadcast %cst_62 : f32 to vector<2x512xf32>
      %c0_63 = arith.constant 0 : index
      %c0_64 = arith.constant 0 : index
      %95 = vector.load %arg10[%c0_63, %c0_64] : memref<2x512xf32, #tpu.memory_space<vmem>>, vector<2x512xf32>
      tpu.vector_store %arg10[%c0_63, %c0_64], %94 {strides = array<i32>} : memref<2x512xf32, #tpu.memory_space<vmem>>, vector<2x512xf32>,
    } else {
    }
    %c0 = arith.constant 0 : index
    %c0_1 = arith.constant 0 : index
    %c0_2 = arith.constant 0 : index
    %c0_3 = arith.constant 0 : index
    %3 = vector.load %arg3[%c0, %c0_1, %c0_2, %c0_3] : memref<1x3x2x512xf32, #tpu.memory_space<vmem>>, vector<1x1x2x512xf32>
    %4 = vector.shape_cast %3 : vector<1x1x2x512xf32> to vector<2x512xf32>
    %c0_4 = arith.constant 0 : index
    %c1 = arith.constant 1 : index
    %c0_5 = arith.constant 0 : index
    %c0_6 = arith.constant 0 : index
    %5 = vector.load %arg3[%c0_4, %c1, %c0_5, %c0_6] : memref<1x3x2x512xf32, #tpu.memory_space<vmem>>, vector<1x1x2x512xf32>
    %6 = vector.shape_cast %5 : vector<1x1x2x512xf32> to vector<2x512xf32>
    %c0_7 = arith.constant 0 : index
    %c2 = arith.constant 2 : index
    %c0_8 = arith.constant 0 : index
    %c0_9 = arith.constant 0 : index
    %7 = vector.load %arg3[%c0_7, %c2, %c0_8, %c0_9] : memref<1x3x2x512xf32, #tpu.memory_space<vmem>>, vector<1x1x2x512xf32>
    %8 = vector.shape_cast %7 : vector<1x1x2x512xf32> to vector<2x512xf32>
    %9 = tpu.bitcast %8 : vector<2x512xf32> -> vector<2x512xi32>
    %c-2_i32 = arith.constant -2 : i32
    %10 = vector.broadcast %c-2_i32 : i32 to vector<2x512xi32>
    %11 = arith.cmpi eq, %9, %10 : vector<2x512xi32>
    %c16_i32 = arith.constant 16 : i32
    %12 = vector.broadcast %c16_i32 : i32 to vector<2x512xi32>
    %13 = arith.shrsi %9, %12 : vector<2x512xi32>
    %c65535_i32 = arith.constant 65535 : i32
    %14 = vector.broadcast %c65535_i32 : i32 to vector<2x512xi32>
    %15 = arith.andi %9, %14 : vector<2x512xi32>
    %c16_i32_10 = arith.constant 16 : i32
    %16 = vector.broadcast %c16_i32_10 : i32 to vector<2x512xi32>
    %17 = arith.muli %13, %16 : vector<2x512xi32>
    %18 = arith.addi %17, %15 : vector<2x512xi32>
    %19 = tpu.iota {dimensions = array<i32: 0>} : vector<256x512xi32>
    %20 = vector.extract_strided_slice %18 {offsets = [0, 0], sizes = [1, 512], strides = [1, 1]} : vector<2x512xi32> to vector<1x512xi32>
    %21 = vector.broadcast %20 : vector<1x512xi32> to vector<256x512xi32>
    %22 = arith.cmpi eq, %19, %21 : vector<256x512xi32>
    %23 = arith.extui %22 : vector<256x512xi1> to vector<256x512xi32>
    %24 = arith.sitofp %23 : vector<256x512xi32> to vector<256x512xf32>
    %c0_11 = arith.constant 0 : index
    %c0_12 = arith.constant 0 : index
    %c0_13 = arith.constant 0 : index
    %25 = vector.load %arg2[%c0_11, %c0_12, %c0_13] : memref<2x2x256xf32, #tpu.memory_space<vmem>>, vector<1x2x256xf32>
    %26 = vector.shape_cast %25 : vector<1x2x256xf32> to vector<2x256xf32>
    %cst = arith.constant dense<0.000000e+00> : vector<2x512xf32>
    %27 = tpu.matmul %26, %24, %cst {dimension_numbers = #tpu.dot_dimension_numbers<[1], [0], [0], [1], [0, 0, 1, 1], [], []>} : vector<2x256xf32>, vector<256x512xf32>, vector<2x512xf32> -> vector<2x512xf32>
    %28 = vector.extract_strided_slice %27 {offsets = [0, 0], sizes = [1, 512], strides = [1, 1]} : vector<2x512xf32> to vector<1x512xf32>
    %29 = vector.extract_strided_slice %27 {offsets = [1, 0], sizes = [1, 512], strides = [1, 1]} : vector<2x512xf32> to vector<1x512xf32>
    %30 = vector.extract_strided_slice %18 {offsets = [1, 0], sizes = [1, 512], strides = [1, 1]} : vector<2x512xi32> to vector<1x512xi32>
    %31 = vector.broadcast %30 : vector<1x512xi32> to vector<256x512xi32>
    %32 = arith.cmpi eq, %19, %31 : vector<256x512xi32>
    %33 = arith.extui %32 : vector<256x512xi1> to vector<256x512xi32>
    %34 = arith.sitofp %33 : vector<256x512xi32> to vector<256x512xf32>
    %c1_14 = arith.constant 1 : index
    %c0_15 = arith.constant 0 : index
    %c0_16 = arith.constant 0 : index
    %35 = vector.load %arg2[%c1_14, %c0_15, %c0_16] : memref<2x2x256xf32, #tpu.memory_space<vmem>>, vector<1x2x256xf32>
    %36 = vector.shape_cast %35 : vector<1x2x256xf32> to vector<2x256xf32>
    %cst_17 = arith.constant dense<0.000000e+00> : vector<2x512xf32>
    %37 = tpu.matmul %36, %34, %cst_17 {dimension_numbers = #tpu.dot_dimension_numbers<[1], [0], [0], [1], [0, 0, 1, 1], [], []>} : vector<2x256xf32>, vector<256x512xf32>, vector<2x512xf32> -> vector<2x512xf32>
    %38 = vector.extract_strided_slice %37 {offsets = [0, 0], sizes = [1, 512], strides = [1, 1]} : vector<2x512xf32> to vector<1x512xf32>
    %39 = vector.extract_strided_slice %37 {offsets = [1, 0], sizes = [1, 512], strides = [1, 1]} : vector<2x512xf32> to vector<1x512xf32>
    %40 = tpu.concatenate %28, %38 in 0 : vector<1x512xf32>, vector<1x512xf32> -> vector<2x512xf32>
    %41 = tpu.concatenate %29, %39 in 0 : vector<1x512xf32>, vector<1x512xf32> -> vector<2x512xf32>
    %cst_18 = arith.constant 5.000000e-01 : f32
    %42 = vector.broadcast %cst_18 : f32 to vector<2x512xf32>
    %43 = arith.cmpf ogt, %41, %42 : vector<2x512xf32>
    %44 = arith.extui %43 : vector<2x512xi1> to vector<2x512xi32>
    %45 = arith.sitofp %44 : vector<2x512xi32> to vector<2x512xf32>
    %46 = arith.subf %4, %40 : vector<2x512xf32>
    %47 = math.absf %46 : vector<2x512xf32>
    %48 = arith.cmpf olt, %47, %40 : vector<2x512xf32>
    %49 = arith.andi %48, %43 : vector<2x512xi1>
    %50 = arith.extui %49 : vector<2x512xi1> to vector<2x512xi32>
    %51 = arith.sitofp %50 : vector<2x512xi32> to vector<2x512xf32>
    %52 = math.absf %40 : vector<2x512xf32>
    %53 = arith.divf %47, %52 : vector<2x512xf32>
    %cst_19 = arith.constant 1.000000e+00 : f32
    %54 = vector.broadcast %cst_19 : f32 to vector<2x512xf32>
    %55 = arith.subf %54, %53 : vector<2x512xf32>
    %56 = arith.mulf %55, %51 : vector<2x512xf32>
    %57 = arith.subf %6, %56 : vector<2x512xf32>
    %58 = math.absf %57 : vector<2x512xf32>
    %59 = arith.mulf %58, %51 : vector<2x512xf32>
    %cst_20 = arith.constant 0.000000e+00 : f32
    %60 = vector.broadcast %cst_20 : f32 to vector<2x512xf32>
    %61 = arith.select %11, %60, %59 : vector<2x512xi1>, vector<2x512xf32>
    %c0_21 = arith.constant 0 : index
    %c0_22 = arith.constant 0 : index
    %62 = vector.load %arg5[%c0_21, %c0_22] : memref<2x512xf32, #tpu.memory_space<vmem>>, vector<2x512xf32>
    %63 = arith.mulf %47, %45 : vector<2x512xf32>
    %64 = arith.addf %62, %63 : vector<2x512xf32>
    %c0_23 = arith.constant 0 : index
    %c0_24 = arith.constant 0 : index
    %65 = vector.load %arg5[%c0_23, %c0_24] : memref<2x512xf32, #tpu.memory_space<vmem>>, vector<2x512xf32>
    tpu.vector_store %arg5[%c0_23, %c0_24], %64 {strides = array<i32>} : memref<2x512xf32, #tpu.memory_space<vmem>>, vector<2x512xf32>,
    %c0_25 = arith.constant 0 : index
    %c0_26 = arith.constant 0 : index
    %66 = vector.load %arg6[%c0_25, %c0_26] : memref<2x512xf32, #tpu.memory_space<vmem>>, vector<2x512xf32>
    %67 = arith.addf %66, %45 : vector<2x512xf32>
    %c0_27 = arith.constant 0 : index
    %c0_28 = arith.constant 0 : index
    %68 = vector.load %arg6[%c0_27, %c0_28] : memref<2x512xf32, #tpu.memory_space<vmem>>, vector<2x512xf32>
    tpu.vector_store %arg6[%c0_27, %c0_28], %67 {strides = array<i32>} : memref<2x512xf32, #tpu.memory_space<vmem>>, vector<2x512xf32>,
    %c0_29 = arith.constant 0 : index
    %c0_30 = arith.constant 0 : index
    %69 = vector.load %arg7[%c0_29, %c0_30] : memref<2x512xf32, #tpu.memory_space<vmem>>, vector<2x512xf32>
    %70 = arith.addf %69, %61 : vector<2x512xf32>
    %c0_31 = arith.constant 0 : index
    %c0_32 = arith.constant 0 : index
    %71 = vector.load %arg7[%c0_31, %c0_32] : memref<2x512xf32, #tpu.memory_space<vmem>>, vector<2x512xf32>
    tpu.vector_store %arg7[%c0_31, %c0_32], %70 {strides = array<i32>} : memref<2x512xf32, #tpu.memory_space<vmem>>, vector<2x512xf32>,
    %c0_33 = arith.constant 0 : index
    %c0_34 = arith.constant 0 : index
    %72 = vector.load %arg8[%c0_33, %c0_34] : memref<2x512xf32, #tpu.memory_space<vmem>>, vector<2x512xf32>
    %73 = arith.addf %72, %51 : vector<2x512xf32>
    %c0_35 = arith.constant 0 : index
    %c0_36 = arith.constant 0 : index
    %74 = vector.load %arg8[%c0_35, %c0_36] : memref<2x512xf32, #tpu.memory_space<vmem>>, vector<2x512xf32>
    tpu.vector_store %arg8[%c0_35, %c0_36], %73 {strides = array<i32>} : memref<2x512xf32, #tpu.memory_space<vmem>>, vector<2x512xf32>,
    %c0_37 = arith.constant 0 : index
    %c0_38 = arith.constant 0 : index
    %75 = vector.load %arg9[%c0_37, %c0_38] : memref<2x512xf32, #tpu.memory_space<vmem>>, vector<2x512xf32>
    %76 = arith.addf %75, %4 : vector<2x512xf32>
    %c0_39 = arith.constant 0 : index
    %c0_40 = arith.constant 0 : index
    %77 = vector.load %arg9[%c0_39, %c0_40] : memref<2x512xf32, #tpu.memory_space<vmem>>, vector<2x512xf32>
    tpu.vector_store %arg9[%c0_39, %c0_40], %76 {strides = array<i32>} : memref<2x512xf32, #tpu.memory_space<vmem>>, vector<2x512xf32>,
    %c0_41 = arith.constant 0 : index
    %c0_42 = arith.constant 0 : index
    %78 = vector.load %arg10[%c0_41, %c0_42] : memref<2x512xf32, #tpu.memory_space<vmem>>, vector<2x512xf32>
    %79 = arith.addf %78, %6 : vector<2x512xf32>
    %c0_43 = arith.constant 0 : index
    %c0_44 = arith.constant 0 : index
    %80 = vector.load %arg10[%c0_43, %c0_44] : memref<2x512xf32, #tpu.memory_space<vmem>>, vector<2x512xf32>
    tpu.vector_store %arg10[%c0_43, %c0_44], %79 {strides = array<i32>} : memref<2x512xf32, #tpu.memory_space<vmem>>, vector<2x512xf32>,
    %c0_i32_45 = arith.constant 0 : i32
    %81 = arith.cmpi eq, %arg1, %c0_i32_45 : i32
    %82 = arith.extui %81 : i1 to i32
    %c0_i32_46 = arith.constant 0 : i32
    %83 = arith.cmpi ne, %82, %c0_i32_46 : i32
    scf.if %83 {
      %c0_47 = arith.constant 0 : index
      %c0_48 = arith.constant 0 : index
      %84 = vector.load %arg5[%c0_47, %c0_48] : memref<2x512xf32, #tpu.memory_space<vmem>>, vector<2x512xf32>
      %85 = vector.shape_cast %84 : vector<2x512xf32> to vector<1x2x512xf32>
      %cst_49 = arith.constant dense<0.000000e+00> : vector<1xf32>
      %86 = vector.multi_reduction <add>, %85, %cst_49 [1, 2] : vector<1x2x512xf32> to vector<1xf32>
      %87 = vector.shape_cast %86 : vector<1xf32> to vector<1x1x1xf32>
      %88 = vector.extract %87[0, 0, 0] : f32 from vector<1x1x1xf32>
      %c0_50 = arith.constant 0 : index
      %c0_51 = arith.constant 0 : index
      %89 = vector.load %arg6[%c0_50, %c0_51] : memref<2x512xf32, #tpu.memory_space<vmem>>, vector<2x512xf32>
      %90 = vector.shape_cast %89 : vector<2x512xf32> to vector<1x2x512xf32>
      %cst_52 = arith.constant dense<0.000000e+00> : vector<1xf32>
      %91 = vector.multi_reduction <add>, %90, %cst_52 [1, 2] : vector<1x2x512xf32> to vector<1xf32>
      %92 = vector.shape_cast %91 : vector<1xf32> to vector<1x1x1xf32>
      %93 = vector.extract %92[0, 0, 0] : f32 from vector<1x1x1xf32>
      %c0_53 = arith.constant 0 : index
      %c0_54 = arith.constant 0 : index
      %94 = vector.load %arg7[%c0_53, %c0_54] : memref<2x512xf32, #tpu.memory_space<vmem>>, vector<2x512xf32>
      %95 = vector.shape_cast %94 : vector<2x512xf32> to vector<1x2x512xf32>
      %cst_55 = arith.constant dense<0.000000e+00> : vector<1xf32>
      %96 = vector.multi_reduction <add>, %95, %cst_55 [1, 2] : vector<1x2x512xf32> to vector<1xf32>
      %97 = vector.shape_cast %96 : vector<1xf32> to vector<1x1x1xf32>
      %98 = vector.extract %97[0, 0, 0] : f32 from vector<1x1x1xf32>
      %c0_56 = arith.constant 0 : index
      %c0_57 = arith.constant 0 : index
      %99 = vector.load %arg8[%c0_56, %c0_57] : memref<2x512xf32, #tpu.memory_space<vmem>>, vector<2x512xf32>
      %100 = vector.shape_cast %99 : vector<2x512xf32> to vector<1x2x512xf32>
      %cst_58 = arith.constant dense<0.000000e+00> : vector<1xf32>
      %101 = vector.multi_reduction <add>, %100, %cst_58 [1, 2] : vector<1x2x512xf32> to vector<1xf32>
      %102 = vector.shape_cast %101 : vector<1xf32> to vector<1x1x1xf32>
      %103 = vector.extract %102[0, 0, 0] : f32 from vector<1x1x1xf32>
      %c0_59 = arith.constant 0 : index
      %c0_60 = arith.constant 0 : index
      %104 = vector.load %arg9[%c0_59, %c0_60] : memref<2x512xf32, #tpu.memory_space<vmem>>, vector<2x512xf32>
      %105 = vector.shape_cast %104 : vector<2x512xf32> to vector<1x2x512xf32>
      %cst_61 = arith.constant dense<0.000000e+00> : vector<1xf32>
      %106 = vector.multi_reduction <add>, %105, %cst_61 [1, 2] : vector<1x2x512xf32> to vector<1xf32>
      %107 = vector.shape_cast %106 : vector<1xf32> to vector<1x1x1xf32>
      %108 = vector.extract %107[0, 0, 0] : f32 from vector<1x1x1xf32>
      %c0_62 = arith.constant 0 : index
      %c0_63 = arith.constant 0 : index
      %109 = vector.load %arg10[%c0_62, %c0_63] : memref<2x512xf32, #tpu.memory_space<vmem>>, vector<2x512xf32>
      %110 = vector.shape_cast %109 : vector<2x512xf32> to vector<1x2x512xf32>
      %cst_64 = arith.constant dense<0.000000e+00> : vector<1xf32>
      %111 = vector.multi_reduction <add>, %110, %cst_64 [1, 2] : vector<1x2x512xf32> to vector<1xf32>
      %112 = vector.shape_cast %111 : vector<1xf32> to vector<1x1x1xf32>
      %113 = vector.extract %112[0, 0, 0] : f32 from vector<1x1x1xf32>
      %114 = tpu.iota {dimensions = array<i32: 2>} : vector<1x1x8xi32>
      %cst_65 = arith.constant 0.000000e+00 : f32
      %115 = vector.broadcast %cst_65 : f32 to vector<1x1x8xf32>
      %c0_i32_66 = arith.constant 0 : i32
      %116 = vector.broadcast %c0_i32_66 : i32 to vector<1x1x8xi32>
      %117 = arith.cmpi eq, %114, %116 : vector<1x1x8xi32>
      %118 = vector.broadcast %88 : f32 to vector<1x1x8xf32>
      %119 = arith.select %117, %118, %115 : vector<1x1x8xi1>, vector<1x1x8xf32>
      %c1_i32 = arith.constant 1 : i32
      %120 = vector.broadcast %c1_i32 : i32 to vector<1x1x8xi32>
      %121 = arith.cmpi eq, %114, %120 : vector<1x1x8xi32>
      %122 = vector.broadcast %93 : f32 to vector<1x1x8xf32>
      %123 = arith.select %121, %122, %119 : vector<1x1x8xi1>, vector<1x1x8xf32>
      %c2_i32 = arith.constant 2 : i32
      %124 = vector.broadcast %c2_i32 : i32 to vector<1x1x8xi32>
      %125 = arith.cmpi eq, %114, %124 : vector<1x1x8xi32>
      %126 = vector.broadcast %98 : f32 to vector<1x1x8xf32>
      %127 = arith.select %125, %126, %123 : vector<1x1x8xi1>, vector<1x1x8xf32>
      %c3_i32 = arith.constant 3 : i32
      %128 = vector.broadcast %c3_i32 : i32 to vector<1x1x8xi32>
      %129 = arith.cmpi eq, %114, %128 : vector<1x1x8xi32>
      %130 = vector.broadcast %103 : f32 to vector<1x1x8xf32>
      %131 = arith.select %129, %130, %127 : vector<1x1x8xi1>, vector<1x1x8xf32>
      %c4_i32 = arith.constant 4 : i32
      %132 = vector.broadcast %c4_i32 : i32 to vector<1x1x8xi32>
      %133 = arith.cmpi eq, %114, %132 : vector<1x1x8xi32>
      %134 = vector.broadcast %108 : f32 to vector<1x1x8xf32>
      %135 = arith.select %133, %134, %131 : vector<1x1x8xi1>, vector<1x1x8xf32>
      %c5_i32 = arith.constant 5 : i32
      %136 = vector.broadcast %c5_i32 : i32 to vector<1x1x8xi32>
      %137 = arith.cmpi eq, %114, %136 : vector<1x1x8xi32>
      %138 = vector.broadcast %113 : f32 to vector<1x1x8xf32>
      %139 = arith.select %137, %138, %135 : vector<1x1x8xi1>, vector<1x1x8xf32>
      %c0_67 = arith.constant 0 : index
      %c0_68 = arith.constant 0 : index
      %c0_69 = arith.constant 0 : index
      %140 = vector.load %arg4[%c0_67, %c0_68, %c0_69] : memref<1x1x8xf32, #tpu.memory_space<vmem>>, vector<1x1x8xf32>
      tpu.vector_store %arg4[%c0_67, %c0_68, %c0_69], %139 {strides = array<i32>} : memref<1x1x8xf32, #tpu.memory_space<vmem>>, vector<1x1x8xf32>,
    } else {
    }
    return
  }
  func.func @transform_0(%arg0: i32, %arg1: i32) -> (i32, i32, i32) {
    %c0_i32 = arith.constant 0 : i32
    %c0_i32_0 = arith.constant 0 : i32
    %c0_i32_1 = arith.constant 0 : i32
    %c0_i32_2 = arith.constant 0 : i32
    return %c0_i32, %c0_i32_0, %c0_i32_1 : i32, i32, i32
  }
  func.func @transform_1(%arg0: i32, %arg1: i32) -> (i32, i32, i32, i32) {
    %c0_i32 = arith.constant 0 : i32
    %c0_i32_0 = arith.constant 0 : i32
    %c0_i32_1 = arith.constant 0 : i32
    return %arg0, %c0_i32, %c0_i32_0, %arg1 : i32, i32, i32, i32
  }
  func.func @transform_2(%arg0: i32, %arg1: i32) -> (i32, i32, i32) {
    %c0_i32 = arith.constant 0 : i32
    %c0_i32_0 = arith.constant 0 : i32
    %c0_i32_1 = arith.constant 0 : i32
    return %arg0, %c0_i32, %c0_i32_0 : i32, i32, i32
  }
}

</mosaic_0001>

<llo_original>
// kernel: tpu_custom_call.1
$region0: #{tpu_custom_call.1}
  #allocation0 [shape = 'u32[]', space=smem, size = 0x4, offset = 0x4, fixed_abs, tag = 'smem constant byte address 0x4 - core index']
  #allocation1 [shape = 'u32[144,128]{1,0:T(1,128)}', space=vmem, size = 0x12000, scoped, tag = 'internal scratch']
  #allocation2 [shape = 'f32[2,512]{1,0:T(2,128)}', space=vmem, size = 0x1000, scoped, tag = 'scratch operand']
  #allocation3 [shape = 'f32[2,512]{1,0:T(2,128)}', space=vmem, size = 0x1000, scoped, tag = 'scratch operand']
  #allocation4 [shape = 'f32[2,512]{1,0:T(2,128)}', space=vmem, size = 0x1000, scoped, tag = 'scratch operand']
  #allocation5 [shape = 'f32[2,512]{1,0:T(2,128)}', space=vmem, size = 0x1000, scoped, tag = 'scratch operand']
  #allocation6 [shape = 'f32[2,512]{1,0:T(2,128)}', space=vmem, size = 0x1000, scoped, tag = 'scratch operand']
  #allocation7 [shape = 'f32[2,512]{1,0:T(2,128)}', space=vmem, size = 0x1000, scoped, tag = 'scratch operand']
  %s0 = inlined_call_operand.hbm [shape: f32[2,2,256], index: 0, kind: input, shape index: {}]
  %s1 = inlined_call_operand.hbm [shape: f32[4,3,2,512], index: 1, kind: input, shape index: {}]
  %s2 = inlined_call_operand.hbm [shape: f32[4,1,8], index: 2, kind: output, shape index: {}]
  %s3 = sld [smem:[#allocation0]]
  $region57: #{tpu_custom_call.1} parent=0
    _
  %s5 = ssub.s32 1, %s3
  %s6 = scalar_select 0, %s5, %s3
  $region1: #{tpu_custom_call.1} parent=0
    #allocation8 [shape = 'u8[4096]{0}', space=vmem, size = 0x1000, scoped, tag = 'input window, operand 0, single buffered']
    #allocation9 [shape = 's32[2]{0}', space=sflag, size = 0x8, scoped, tag = 'scoped memory for tpu_custom_call.1']
    #allocation10 [shape = 's32[2]{0}', space=sflag, size = 0x8, scoped, tag = 'scoped memory for tpu_custom_call.1']
    #allocation11 [shape = 'u8[24576]{0}', space=vmem, size = 0x6000, scoped, tag = 'input window, operand 1']
    #allocation12 [shape = 's32[2]{0}', space=sflag, size = 0x8, scoped, tag = 'scoped memory for tpu_custom_call.1']
    #allocation13 [shape = 'u8[1024]{0}', space=vmem, size = 0x400, scoped, tag = 'output window, operand 0']
    %7 = vsyncpa [#allocation9], 0
    %8 = vsyncpa [#allocation12], 0
    %s9 = scalar_lea.sflag [#allocation12], 1
    %10 = vsyncpa %s9, 0
    %11 = vsyncpa [#allocation10], 0
    %s12 = scalar_lea.sflag [#allocation10], 1
    %13 = vsyncpa %s12, 0
    loop: start=0, step=1, limit=6
    $region2: #{tpu_custom_call.1} parent=1 // loop_pre_header
      _
    $region3: #{tpu_custom_call.1} parent=1 // loop_header
      %s15 = sphi 0, %s19
      %p16 = scmp.ge.s32.totalorder %s15, 6
      %s22 = sphi 0, %s34
      %s23 = sphi 0, %s30
      %s24 = sphi 0, %s22
      %s25 = sphi 0, %s23
      %s26 = sphi 0, %s24
      %s27 = sphi 0, %s25
      %s35 = sphi 0, %s35
      %s37 = sphi 0, %s35
      %s38 = sphi 0, %s37
      %s52 = sphi 0, %s38
      %s60 = sphi 0, %s62
      %s63 = sphi 0, %s60
      %s64 = sphi 0, %s63
      %s80 = sphi 0, %s64
      %s86 = sphi 0, %s88
      %s89 = sphi 0, %s86
      %s90 = sphi 0, %s89
      %s106 = sphi 0, %s90
    $region4: #{tpu_custom_call.1} parent=1 // loop_header_branch
      %18 = sbr.rel (%p16) target = $region8
    $region5: #{tpu_custom_call.1} parent=1 // loop_body
      %s20 = ssub.s32 %s15, 1
      %s21 = ssub.s32 %s15, 2
      %s28 = sadd.s32 1, %s23
      %p29 = scmp.ge.s32.totalorder %s28, 1
      %s30 = scalar_select %p29, 0, %s28
      %s31 = sadd.s32 1, %s22
      %s32 = scalar_select %p29, %s31, %s22
      %p33 = scmp.ge.s32.totalorder %s32, 4
      %s34 = scalar_select %p33, 0, %s32
      %s36 = sadd.s32 %s35, 1
      %p39 = scmp.eq.s32.totalorder %s15, 3
      %p40 = scmp.ne.s32.totalorder %s35, %s37
      %p41 = scmp.eq.s32.totalorder %s15, 0
      %p42 = por %p40, %p41
      %p43 = scmp.ne.s32.totalorder %s35, %s37
      %p44 = scmp.eq.s32.totalorder %s20, 3
      %p45 = por %p43, %p44
      %p46 = scmp.ne.s32.totalorder %s37, %s38
      %p47 = scmp.eq.s32.totalorder %s20, 0
      %p48 = por %p46, %p47
      %p49 = scmp.ne.s32.totalorder %s37, %s38
      %p50 = scmp.eq.s32.totalorder %s21, 3
      %p51 = por %p49, %p50
      %p53 = scmp.ne.s32.totalorder %s38, %s52
      %p54 = scmp.eq.s32.totalorder %s21, 0
      %p55 = por %p53, %p54
      %s56 = ssub.s32 %s22, %s34
      %s57 = ssub.s32 %s23, %s30
      %s58 = sor.u32 %s56, %s57
      %p59 = scmp.eq.s32.totalorder %s58, 0
      %s61 = sadd.s32 %s60, 1
      %s62 = scalar_select %p59, %s60, %s61
      %p65 = pneg %p59
      %p66 = scmp.eq.s32.totalorder %s15, 3
      %p67 = por %p65, %p66
      %p68 = scmp.ne.s32.totalorder %s60, %s63
      %p69 = scmp.eq.s32.totalorder %s15, 0
      %p70 = por %p68, %p69
      %p71 = scmp.ne.s32.totalorder %s60, %s63
      %p72 = scmp.eq.s32.totalorder %s20, 3
      %p73 = por %p71, %p72
      %p74 = scmp.ne.s32.totalorder %s63, %s64
      %p75 = scmp.eq.s32.totalorder %s20, 0
      %p76 = por %p74, %p75
      %p77 = scmp.ne.s32.totalorder %s63, %s64
      %p78 = scmp.eq.s32.totalorder %s21, 3
      %p79 = por %p77, %p78
      %p81 = scmp.ne.s32.totalorder %s64, %s80
      %p82 = scmp.eq.s32.totalorder %s21, 0
      %p83 = por %p81, %p82
      %s84 = ssub.s32 %s22, %s34
      %p85 = scmp.eq.s32.totalorder %s84, 0
      %s87 = sadd.s32 %s86, 1
      %s88 = scalar_select %p85, %s86, %s87
      %p91 = pneg %p85
      %p92 = scmp.eq.s32.totalorder %s15, 3
      %p93 = por %p91, %p92
      %p94 = scmp.ne.s32.totalorder %s86, %s89
      %p95 = scmp.eq.s32.totalorder %s15, 0
      %p96 = por %p94, %p95
      %p97 = scmp.ne.s32.totalorder %s86, %s89
      %p98 = scmp.eq.s32.totalorder %s20, 3
      %p99 = por %p97, %p98
      %p100 = scmp.ne.s32.totalorder %s89, %s90
      %p101 = scmp.eq.s32.totalorder %s20, 0
      %p102 = por %p100, %p101
      %p103 = scmp.ne.s32.totalorder %s89, %s90
      %p104 = scmp.eq.s32.totalorder %s21, 3
      %p105 = por %p103, %p104
      %p107 = scmp.ne.s32.totalorder %s90, %s106
      %p108 = scmp.eq.s32.totalorder %s21, 0
      %p109 = por %p107, %p108
      %p110 = scmp.le.s32.totalorder 1, %s15
      %p111 = scmp.lt.s32.totalorder %s15, 5
      %p112 = pnand %p110, %p111
      %p113 = pneg %p112
      // Predicated region
      $region9: #{tpu_custom_call.1} parent=5 // pred_check
        _
      $region10: #{tpu_custom_call.1} parent=5 // pred_check_branch
        %115 = sbr.rel (%p112) target = $region12
      $region11: #{tpu_custom_call.1} parent=5 // pred_region
        %s116 = ssub.s32 %s15, 1
        // Predicated region
        $region13: #{tpu_custom_call.1} parent=11 // pred_check
          %p117 = pneg %p48
        $region14: #{tpu_custom_call.1} parent=11 // pred_check_branch
          %119 = sbr.rel (%p117) target = $region16
        $region15: #{tpu_custom_call.1} parent=11 // pred_region
          %s121 = ssub.s32 128, 128
          %122 = vsyncadd [#allocation9], %s121
          %s123 = sshll.u32 [#allocation8], 4
          %s124 = int_to_ptr.vmem [resolvable:$true] %s123
          %129 = dma.hbm_to_vmem [thread:$0]  %s0, 128, %s124, [#allocation9], 64, 64, 4
        $region16: #{tpu_custom_call.1} parent=11 // pred_fallthru
          _
      $region12: #{tpu_custom_call.1} parent=5 // pred_fallthru
        _
      %p130 = scmp.lt.s32.totalorder %s15, 4
      // Predicated region
      $region17: #{tpu_custom_call.1} parent=5 // pred_check
        %p131 = pneg %p130
      $region18: #{tpu_custom_call.1} parent=5 // pred_check_branch
        %133 = sbr.rel (%p131) target = $region20
      $region19: #{tpu_custom_call.1} parent=5 // pred_region
        // Predicated region
        $region21: #{tpu_custom_call.1} parent=19 // pred_check
          %p134 = pneg %p70
        $region22: #{tpu_custom_call.1} parent=19 // pred_check_branch
          %136 = sbr.rel (%p134) target = $region24
        $region23: #{tpu_custom_call.1} parent=19 // pred_region
          %s137 = sand.u32 %s60, 1
          %s138 = scalar_lea.sflag [#allocation12], %s137
          %s139 = sand.u32 %s60, 1
          %s140 = smul.addr %s139, 24
          %s141 = scalar_lea.vmem [#allocation11], %s140
          %s142 = smul.u32 4, %s23
          %s144 = ssub.s32 384, 384
          %145 = vsyncadd %s138, %s144
          %s146 = smul.addr %s22, 12
          %s147 = sadd.s32 %s142, %s146
          %s148 = smul.addr %s147, 32
          %s149 = scalar_lea.hbm %s1, %s148
          %s150 = sshll.u32 %s141, 4
          %s151 = int_to_ptr.vmem [resolvable:$true] %s150
          %156 = dma.hbm_to_vmem [thread:$0]  %s149, 384, %s151, %s138, 128, 128, 8
        $region24: #{tpu_custom_call.1} parent=19 // pred_fallthru
          _
      $region20: #{tpu_custom_call.1} parent=5 // pred_fallthru
        _
      %p157 = scmp.le.s32.totalorder 1, %s15
      %p158 = scmp.lt.s32.totalorder %s15, 5
      %p159 = pnand %p157, %p158
      %p160 = pneg %p159
      // Predicated region
      $region25: #{tpu_custom_call.1} parent=5 // pred_check
        _
      $region26: #{tpu_custom_call.1} parent=5 // pred_check_branch
        %162 = sbr.rel (%p159) target = $region28
      $region27: #{tpu_custom_call.1} parent=5 // pred_region
        %s163 = ssub.s32 %s15, 1
        // Predicated region
        $region29: #{tpu_custom_call.1} parent=27 // pred_check
          %p164 = pneg %p48
        $region30: #{tpu_custom_call.1} parent=27 // pred_check_branch
          %166 = sbr.rel (%p164) target = $region32
        $region31: #{tpu_custom_call.1} parent=27 // pred_region
          %167 = dma.done [#allocation9], 128
        $region32: #{tpu_custom_call.1} parent=27 // pred_fallthru
          _
        %s168 = sand.u32 %s63, 1
        %s169 = scalar_lea.sflag [#allocation12], %s168
        %s170 = sand.u32 %s63, 1
        %s171 = smul.addr %s170, 24
        %s172 = scalar_lea.vmem [#allocation11], %s171
        // Predicated region
        $region33: #{tpu_custom_call.1} parent=27 // pred_check
          %p173 = pneg %p76
        $region34: #{tpu_custom_call.1} parent=27 // pred_check_branch
          %175 = sbr.rel (%p173) target = $region36
        $region35: #{tpu_custom_call.1} parent=27 // pred_region
          %176 = dma.done %s169, 384
        $region36: #{tpu_custom_call.1} parent=27 // pred_fallthru
          _
        %p177 = pneg %p48
        %p178 = pneg %p45
        %s179 = sand.u32 %s63, 1
        %s180 = scalar_lea.sflag [#allocation12], %s179
        %s181 = sand.u32 %s63, 1
        %s182 = smul.addr %s181, 24
        %s183 = scalar_lea.vmem [#allocation11], %s182
        %p184 = pneg %p76
        %p185 = pneg %p73
        %p186 = pneg %p102
        %p187 = pneg %p99
        %s188 = sand.u32 %s89, 1
        %s189 = scalar_lea.sflag [#allocation10], %s188
        %s190 = sand.u32 %s89, 1
        %s191 = scalar_lea.vmem [#allocation13], %s190
        %s192 = smul.u32 4, %s25
        %p193 = scmp.eq.s32.totalorder %s25, 0
        // Predicated region
        $region37: #{tpu_custom_call.1} parent=27 // pred_check
          %p194 = pneg %p193
        $region38: #{tpu_custom_call.1} parent=27 // pred_check_branch
          %196 = sbr.rel (%p194) target = $region40
        $region39: #{tpu_custom_call.1} parent=27 // pred_region
          %197 = vst [vmem:[#allocation2] sm:$0xff] 0.0
          %198 = vst [vmem:[#allocation3] sm:$0xff] 0.0
          %199 = vst [vmem:[#allocation4] sm:$0xff] 0.0
          %200 = vst [vmem:[#allocation5] sm:$0xff] 0.0
          %201 = vst [vmem:[#allocation6] sm:$0xff] 0.0
          %202 = vst [vmem:[#allocation7] sm:$0xff] 0.0
        $region40: #{tpu_custom_call.1} parent=27 // pred_fallthru
          _
        %v203 = vld [vmem:[%s172] sm:$0xff]
        %s204 = scalar_lea.vmem %s172, 8 [#allocation11]
        %v205 = vld [vmem:[%s204] sm:$0xff]
        %s206 = scalar_lea.vmem %s172, 16 [#allocation11]
        %v207 = vld [vmem:[%s206] sm:$0xff]
        %v209 = vcombine.high %v207, %v207
        %v211 = vunpack.c.l.s4 1983009808
        %v212 = vunpack.c.0.s8 %v211
        %v213 = vlaneseq
        %v214 = vshrl.u32 %v213, 7
        %v215 = vsub.s32 %v212, %v214
        %v216 = vrot.slane %v207, %v215
        %v218 = vunpack.c.l.s4 1983009808
        %v219 = vunpack.c.0.s8 %v218
        %v220 = vlaneseq
        %v221 = vshrl.u32 %v220, 7
        %v222 = vsub.s32 %v219, %v221
        %v223 = vrot.slane %v209, %v222
        %v224 = vcombine.high %v216, %v216
        %v225 = vcombine.high %v223, %v223
        %vm226 = vcmp.eq.s32.totalorder %v216, 4294967294
        %vm227 = vcmp.eq.s32.totalorder %v224, 4294967294
        %vm228 = vcmp.eq.s32.totalorder %v223, 4294967294
        %vm229 = vcmp.eq.s32.totalorder %v225, 4294967294
        %v230 = vshra.s32 %v216, 16
        %v231 = vshra.s32 %v224, 16
        %v232 = vshra.s32 %v223, 16
        %v233 = vshra.s32 %v225, 16
        %v234 = vand.u32 %v216, 65535
        %v235 = vand.u32 %v224, 65535
        %v236 = vand.u32 %v223, 65535
        %v237 = vand.u32 %v225, 65535
        %v238 = vmul.u32 %v230, 16
        %v239 = vmul.u32 %v231, 16
        %v240 = vmul.u32 %v232, 16
        %v241 = vmul.u32 %v233, 16
        %v242 = vadd.s32 %v238, %v234
        %v243 = vadd.s32 %v239, %v235
        %v244 = vadd.s32 %v240, %v236
        %v245 = vadd.s32 %v241, %v237
        %v246 = vlaneseq
        %v247 = vshrl.u32 %v246, 7
        %v248 = vadd.s32 %v247, 8
        %v249 = vadd.s32 %v247, 16
        %v250 = vadd.s32 %v247, 24
        %v251 = vadd.s32 %v247, 32
        %v252 = vadd.s32 %v247, 40
        %v253 = vadd.s32 %v247, 48
        %v254 = vadd.s32 %v247, 56
        %v255 = vadd.s32 %v247, 64
        %v256 = vadd.s32 %v247, 72
        %v257 = vadd.s32 %v247, 80
        %v258 = vadd.s32 %v247, 88
        %v259 = vadd.s32 %v247, 96
        %v260 = vadd.s32 %v247, 104
        %v261 = vadd.s32 %v247, 112
        %v262 = vadd.s32 %v247, 120
        %v263 = vadd.s32 %v247, 128
        %v264 = vadd.s32 %v247, 136
        %v265 = vadd.s32 %v247, 144
        %v266 = vadd.s32 %v247, 152
        %v267 = vadd.s32 %v247, 160
        %v268 = vadd.s32 %v247, 168
        %v269 = vadd.s32 %v247, 176
        %v270 = vadd.s32 %v247, 184
        %v271 = vadd.s32 %v247, 192
        %v272 = vadd.s32 %v247, 200
        %v273 = vadd.s32 %v247, 208
        %v274 = vadd.s32 %v247, 216
        %v275 = vadd.s32 %v247, 224
        %v276 = vadd.s32 %v247, 232
        %v277 = vadd.s32 %v247, 240
        %v278 = vadd.s32 %v247, 248
        %v279 = vlaneseq
        %v280 = vshrl.u32 %v279, 7
        %v281 = vsub.s32 0, %v280
        %v282 = vrot.slane %v242, %v281
        %v283 = vlaneseq
        %v284 = vshrl.u32 %v283, 7
        %v285 = vsub.s32 0, %v284
        %v286 = vrot.slane %v243, %v285
        %v287 = vlaneseq
        %v288 = vshrl.u32 %v287, 7
        %v289 = vsub.s32 0, %v288
        %v290 = vrot.slane %v244, %v289
        %v291 = vlaneseq
        %v292 = vshrl.u32 %v291, 7
        %v293 = vsub.s32 0, %v292
        %v294 = vrot.slane %v245, %v293
        %vm295 = vcmp.eq.s32.totalorder %v247, %v282
        %vm296 = vcmp.eq.s32.totalorder %v247, %v286
        %vm297 = vcmp.eq.s32.totalorder %v247, %v290
        %vm298 = vcmp.eq.s32.totalorder %v247, %v294
        %vm299 = vcmp.eq.s32.totalorder %v248, %v282
        %vm300 = vcmp.eq.s32.totalorder %v248, %v286
        %vm301 = vcmp.eq.s32.totalorder %v248, %v290
        %vm302 = vcmp.eq.s32.totalorder %v248, %v294
        %vm303 = vcmp.eq.s32.totalorder %v249, %v282
        %vm304 = vcmp.eq.s32.totalorder %v249, %v286
        %vm305 = vcmp.eq.s32.totalorder %v249, %v290
        %vm306 = vcmp.eq.s32.totalorder %v249, %v294
        %vm307 = vcmp.eq.s32.totalorder %v250, %v282
        %vm308 = vcmp.eq.s32.totalorder %v250, %v286
        %vm309 = vcmp.eq.s32.totalorder %v250, %v290
        %vm310 = vcmp.eq.s32.totalorder %v250, %v294
        %vm311 = vcmp.eq.s32.totalorder %v251, %v282
        %vm312 = vcmp.eq.s32.totalorder %v251, %v286
        %vm313 = vcmp.eq.s32.totalorder %v251, %v290
        %vm314 = vcmp.eq.s32.totalorder %v251, %v294
        %vm315 = vcmp.eq.s32.totalorder %v252, %v282
        %vm316 = vcmp.eq.s32.totalorder %v252, %v286
        %vm317 = vcmp.eq.s32.totalorder %v252, %v290
        %vm318 = vcmp.eq.s32.totalorder %v252, %v294
        %vm319 = vcmp.eq.s32.totalorder %v253, %v282
        %vm320 = vcmp.eq.s32.totalorder %v253, %v286
        %vm321 = vcmp.eq.s32.totalorder %v253, %v290
        %vm322 = vcmp.eq.s32.totalorder %v253, %v294
        %vm323 = vcmp.eq.s32.totalorder %v254, %v282
        %vm324 = vcmp.eq.s32.totalorder %v254, %v286
        %vm325 = vcmp.eq.s32.totalorder %v254, %v290
        %vm326 = vcmp.eq.s32.totalorder %v254, %v294
        %vm327 = vcmp.eq.s32.totalorder %v255, %v282
        %vm328 = vcmp.eq.s32.totalorder %v255, %v286
        %vm329 = vcmp.eq.s32.totalorder %v255, %v290
        %vm330 = vcmp.eq.s32.totalorder %v255, %v294
        %vm331 = vcmp.eq.s32.totalorder %v256, %v282
        %vm332 = vcmp.eq.s32.totalorder %v256, %v286
        %vm333 = vcmp.eq.s32.totalorder %v256, %v290
        %vm334 = vcmp.eq.s32.totalorder %v256, %v294
        %vm335 = vcmp.eq.s32.totalorder %v257, %v282
        %vm336 = vcmp.eq.s32.totalorder %v257, %v286
        %vm337 = vcmp.eq.s32.totalorder %v257, %v290
        %vm338 = vcmp.eq.s32.totalorder %v257, %v294
        %vm339 = vcmp.eq.s32.totalorder %v258, %v282
        %vm340 = vcmp.eq.s32.totalorder %v258, %v286
        %vm341 = vcmp.eq.s32.totalorder %v258, %v290
        %vm342 = vcmp.eq.s32.totalorder %v258, %v294
        %vm343 = vcmp.eq.s32.totalorder %v259, %v282
        %vm344 = vcmp.eq.s32.totalorder %v259, %v286
        %vm345 = vcmp.eq.s32.totalorder %v259, %v290
        %vm346 = vcmp.eq.s32.totalorder %v259, %v294
        %vm347 = vcmp.eq.s32.totalorder %v260, %v282
        %vm348 = vcmp.eq.s32.totalorder %v260, %v286
        %vm349 = vcmp.eq.s32.totalorder %v260, %v290
        %vm350 = vcmp.eq.s32.totalorder %v260, %v294
        %vm351 = vcmp.eq.s32.totalorder %v261, %v282
        %vm352 = vcmp.eq.s32.totalorder %v261, %v286
        %vm353 = vcmp.eq.s32.totalorder %v261, %v290
        %vm354 = vcmp.eq.s32.totalorder %v261, %v294
        %vm355 = vcmp.eq.s32.totalorder %v262, %v282
        %vm356 = vcmp.eq.s32.totalorder %v262, %v286
        %vm357 = vcmp.eq.s32.totalorder %v262, %v290
        %vm358 = vcmp.eq.s32.totalorder %v262, %v294
        %vm359 = vcmp.eq.s32.totalorder %v263, %v282
        %vm360 = vcmp.eq.s32.totalorder %v263, %v286
        %vm361 = vcmp.eq.s32.totalorder %v263, %v290
        %vm362 = vcmp.eq.s32.totalorder %v263, %v294
        %vm363 = vcmp.eq.s32.totalorder %v264, %v282
        %vm364 = vcmp.eq.s32.totalorder %v264, %v286
        %vm365 = vcmp.eq.s32.totalorder %v264, %v290
        %vm366 = vcmp.eq.s32.totalorder %v264, %v294
        %vm367 = vcmp.eq.s32.totalorder %v265, %v282
        %vm368 = vcmp.eq.s32.totalorder %v265, %v286
        %vm369 = vcmp.eq.s32.totalorder %v265, %v290
        %vm370 = vcmp.eq.s32.totalorder %v265, %v294
        %vm371 = vcmp.eq.s32.totalorder %v266, %v282
        %vm372 = vcmp.eq.s32.totalorder %v266, %v286
        %vm373 = vcmp.eq.s32.totalorder %v266, %v290
        %vm374 = vcmp.eq.s32.totalorder %v266, %v294
        %vm375 = vcmp.eq.s32.totalorder %v267, %v282
        %vm376 = vcmp.eq.s32.totalorder %v267, %v286
        %vm377 = vcmp.eq.s32.totalorder %v267, %v290
        %vm378 = vcmp.eq.s32.totalorder %v267, %v294
        %vm379 = vcmp.eq.s32.totalorder %v268, %v282
        %vm380 = vcmp.eq.s32.totalorder %v268, %v286
        %vm381 = vcmp.eq.s32.totalorder %v268, %v290
        %vm382 = vcmp.eq.s32.totalorder %v268, %v294
        %vm383 = vcmp.eq.s32.totalorder %v269, %v282
        %vm384 = vcmp.eq.s32.totalorder %v269, %v286
        %vm385 = vcmp.eq.s32.totalorder %v269, %v290
        %vm386 = vcmp.eq.s32.totalorder %v269, %v294
        %vm387 = vcmp.eq.s32.totalorder %v270, %v282
        %vm388 = vcmp.eq.s32.totalorder %v270, %v286
        %vm389 = vcmp.eq.s32.totalorder %v270, %v290
        %vm390 = vcmp.eq.s32.totalorder %v270, %v294
        %vm391 = vcmp.eq.s32.totalorder %v271, %v282
        %vm392 = vcmp.eq.s32.totalorder %v271, %v286
        %vm393 = vcmp.eq.s32.totalorder %v271, %v290
        %vm394 = vcmp.eq.s32.totalorder %v271, %v294
        %vm395 = vcmp.eq.s32.totalorder %v272, %v282
        %vm396 = vcmp.eq.s32.totalorder %v272, %v286
        %vm397 = vcmp.eq.s32.totalorder %v272, %v290
        %vm398 = vcmp.eq.s32.totalorder %v272, %v294
        %vm399 = vcmp.eq.s32.totalorder %v273, %v282
        %vm400 = vcmp.eq.s32.totalorder %v273, %v286
        %vm401 = vcmp.eq.s32.totalorder %v273, %v290
        %vm402 = vcmp.eq.s32.totalorder %v273, %v294
        %vm403 = vcmp.eq.s32.totalorder %v274, %v282
        %vm404 = vcmp.eq.s32.totalorder %v274, %v286
        %vm405 = vcmp.eq.s32.totalorder %v274, %v290
        %vm406 = vcmp.eq.s32.totalorder %v274, %v294
        %vm407 = vcmp.eq.s32.totalorder %v275, %v282
        %vm408 = vcmp.eq.s32.totalorder %v275, %v286
        %vm409 = vcmp.eq.s32.totalorder %v275, %v290
        %vm410 = vcmp.eq.s32.totalorder %v275, %v294
        %vm411 = vcmp.eq.s32.totalorder %v276, %v282
        %vm412 = vcmp.eq.s32.totalorder %v276, %v286
        %vm413 = vcmp.eq.s32.totalorder %v276, %v290
        %vm414 = vcmp.eq.s32.totalorder %v276, %v294
        %vm415 = vcmp.eq.s32.totalorder %v277, %v282
        %vm416 = vcmp.eq.s32.totalorder %v277, %v286
        %vm417 = vcmp.eq.s32.totalorder %v277, %v290
        %vm418 = vcmp.eq.s32.totalorder %v277, %v294
        %vm419 = vcmp.eq.s32.totalorder %v278, %v282
        %vm420 = vcmp.eq.s32.totalorder %v278, %v286
        %vm421 = vcmp.eq.s32.totalorder %v278, %v290
        %vm422 = vcmp.eq.s32.totalorder %v278, %v294
        %v423 = vsel %vm295, 1, 0
        %v424 = vsel %vm296, 1, 0
        %v425 = vsel %vm297, 1, 0
        %v426 = vsel %vm298, 1, 0
        %v427 = vsel %vm299, 1, 0
        %v428 = vsel %vm300, 1, 0
        %v429 = vsel %vm301, 1, 0
        %v430 = vsel %vm302, 1, 0
        %v431 = vsel %vm303, 1, 0
        %v432 = vsel %vm304, 1, 0
        %v433 = vsel %vm305, 1, 0
        %v434 = vsel %vm306, 1, 0
        %v435 = vsel %vm307, 1, 0
        %v436 = vsel %vm308, 1, 0
        %v437 = vsel %vm309, 1, 0
        %v438 = vsel %vm310, 1, 0
        %v439 = vsel %vm311, 1, 0
        %v440 = vsel %vm312, 1, 0
        %v441 = vsel %vm313, 1, 0
        %v442 = vsel %vm314, 1, 0
        %v443 = vsel %vm315, 1, 0
        %v444 = vsel %vm316, 1, 0
        %v445 = vsel %vm317, 1, 0
        %v446 = vsel %vm318, 1, 0
        %v447 = vsel %vm319, 1, 0
        %v448 = vsel %vm320, 1, 0
        %v449 = vsel %vm321, 1, 0
        %v450 = vsel %vm322, 1, 0
        %v451 = vsel %vm323, 1, 0
        %v452 = vsel %vm324, 1, 0
        %v453 = vsel %vm325, 1, 0
        %v454 = vsel %vm326, 1, 0
        %v455 = vsel %vm327, 1, 0
        %v456 = vsel %vm328, 1, 0
        %v457 = vsel %vm329, 1, 0
        %v458 = vsel %vm330, 1, 0
        %v459 = vsel %vm331, 1, 0
        %v460 = vsel %vm332, 1, 0
        %v461 = vsel %vm333, 1, 0
        %v462 = vsel %vm334, 1, 0
        %v463 = vsel %vm335, 1, 0
        %v464 = vsel %vm336, 1, 0
        %v465 = vsel %vm337, 1, 0
        %v466 = vsel %vm338, 1, 0
        %v467 = vsel %vm339, 1, 0
        %v468 = vsel %vm340, 1, 0
        %v469 = vsel %vm341, 1, 0
        %v470 = vsel %vm342, 1, 0
        %v471 = vsel %vm343, 1, 0
        %v472 = vsel %vm344, 1, 0
        %v473 = vsel %vm345, 1, 0
        %v474 = vsel %vm346, 1, 0
        %v475 = vsel %vm347, 1, 0
        %v476 = vsel %vm348, 1, 0
        %v477 = vsel %vm349, 1, 0
        %v478 = vsel %vm350, 1, 0
        %v479 = vsel %vm351, 1, 0
        %v480 = vsel %vm352, 1, 0
        %v481 = vsel %vm353, 1, 0
        %v482 = vsel %vm354, 1, 0
        %v483 = vsel %vm355, 1, 0
        %v484 = vsel %vm356, 1, 0
        %v485 = vsel %vm357, 1, 0
        %v486 = vsel %vm358, 1, 0
        %v487 = vsel %vm359, 1, 0
        %v488 = vsel %vm360, 1, 0
        %v489 = vsel %vm361, 1, 0
        %v490 = vsel %vm362, 1, 0
        %v491 = vsel %vm363, 1, 0
        %v492 = vsel %vm364, 1, 0
        %v493 = vsel %vm365, 1, 0
        %v494 = vsel %vm366, 1, 0
        %v495 = vsel %vm367, 1, 0
        %v496 = vsel %vm368, 1, 0
        %v497 = vsel %vm369, 1, 0
        %v498 = vsel %vm370, 1, 0
        %v499 = vsel %vm371, 1, 0
        %v500 = vsel %vm372, 1, 0
        %v501 = vsel %vm373, 1, 0
        %v502 = vsel %vm374, 1, 0
        %v503 = vsel %vm375, 1, 0
        %v504 = vsel %vm376, 1, 0
        %v505 = vsel %vm377, 1, 0
        %v506 = vsel %vm378, 1, 0
        %v507 = vsel %vm379, 1, 0
        %v508 = vsel %vm380, 1, 0
        %v509 = vsel %vm381, 1, 0
        %v510 = vsel %vm382, 1, 0
        %v511 = vsel %vm383, 1, 0
        %v512 = vsel %vm384, 1, 0
        %v513 = vsel %vm385, 1, 0
        %v514 = vsel %vm386, 1, 0
        %v515 = vsel %vm387, 1, 0
        %v516 = vsel %vm388, 1, 0
        %v517 = vsel %vm389, 1, 0
        %v518 = vsel %vm390, 1, 0
        %v519 = vsel %vm391, 1, 0
        %v520 = vsel %vm392, 1, 0
        %v521 = vsel %vm393, 1, 0
        %v522 = vsel %vm394, 1, 0
        %v523 = vsel %vm395, 1, 0
        %v524 = vsel %vm396, 1, 0
        %v525 = vsel %vm397, 1, 0
        %v526 = vsel %vm398, 1, 0
        %v527 = vsel %vm399, 1, 0
        %v528 = vsel %vm400, 1, 0
        %v529 = vsel %vm401, 1, 0
        %v530 = vsel %vm402, 1, 0
        %v531 = vsel %vm403, 1, 0
        %v532 = vsel %vm404, 1, 0
        %v533 = vsel %vm405, 1, 0
        %v534 = vsel %vm406, 1, 0
        %v535 = vsel %vm407, 1, 0
        %v536 = vsel %vm408, 1, 0
        %v537 = vsel %vm409, 1, 0
        %v538 = vsel %vm410, 1, 0
        %v539 = vsel %vm411, 1, 0
        %v540 = vsel %vm412, 1, 0
        %v541 = vsel %vm413, 1, 0
        %v542 = vsel %vm414, 1, 0
        %v543 = vsel %vm415, 1, 0
        %v544 = vsel %vm416, 1, 0
        %v545 = vsel %vm417, 1, 0
        %v546 = vsel %vm418, 1, 0
        %v547 = vsel %vm419, 1, 0
        %v548 = vsel %vm420, 1, 0
        %v549 = vsel %vm421, 1, 0
        %v550 = vsel %vm422, 1, 0
        %v551 = vcvt.s32.f32 %v423
        %v552 = vcvt.s32.f32 %v424
        %v553 = vcvt.s32.f32 %v425
        %v554 = vcvt.s32.f32 %v426
        %v555 = vcvt.s32.f32 %v427
        %v556 = vcvt.s32.f32 %v428
        %v557 = vcvt.s32.f32 %v429
        %v558 = vcvt.s32.f32 %v430
        %v559 = vcvt.s32.f32 %v431
        %v560 = vcvt.s32.f32 %v432
        %v561 = vcvt.s32.f32 %v433
        %v562 = vcvt.s32.f32 %v434
        %v563 = vcvt.s32.f32 %v435
        %v564 = vcvt.s32.f32 %v436
        %v565 = vcvt.s32.f32 %v437
        %v566 = vcvt.s32.f32 %v438
        %v567 = vcvt.s32.f32 %v439
        %v568 = vcvt.s32.f32 %v440
        %v569 = vcvt.s32.f32 %v441
        %v570 = vcvt.s32.f32 %v442
        %v571 = vcvt.s32.f32 %v443
        %v572 = vcvt.s32.f32 %v444
        %v573 = vcvt.s32.f32 %v445
        %v574 = vcvt.s32.f32 %v446
        %v575 = vcvt.s32.f32 %v447
        %v576 = vcvt.s32.f32 %v448
        %v577 = vcvt.s32.f32 %v449
        %v578 = vcvt.s32.f32 %v450
        %v579 = vcvt.s32.f32 %v451
        %v580 = vcvt.s32.f32 %v452
        %v581 = vcvt.s32.f32 %v453
        %v582 = vcvt.s32.f32 %v454
        %v583 = vcvt.s32.f32 %v455
        %v584 = vcvt.s32.f32 %v456
        %v585 = vcvt.s32.f32 %v457
        %v586 = vcvt.s32.f32 %v458
        %v587 = vcvt.s32.f32 %v459
        %v588 = vcvt.s32.f32 %v460
        %v589 = vcvt.s32.f32 %v461
        %v590 = vcvt.s32.f32 %v462
        %v591 = vcvt.s32.f32 %v463
        %v592 = vcvt.s32.f32 %v464
        %v593 = vcvt.s32.f32 %v465
        %v594 = vcvt.s32.f32 %v466
        %v595 = vcvt.s32.f32 %v467
        %v596 = vcvt.s32.f32 %v468
        %v597 = vcvt.s32.f32 %v469
        %v598 = vcvt.s32.f32 %v470
        %v599 = vcvt.s32.f32 %v471
        %v600 = vcvt.s32.f32 %v472
        %v601 = vcvt.s32.f32 %v473
        %v602 = vcvt.s32.f32 %v474
        %v603 = vcvt.s32.f32 %v475
        %v604 = vcvt.s32.f32 %v476
        %v605 = vcvt.s32.f32 %v477
        %v606 = vcvt.s32.f32 %v478
        %v607 = vcvt.s32.f32 %v479
        %v608 = vcvt.s32.f32 %v480
        %v609 = vcvt.s32.f32 %v481
        %v610 = vcvt.s32.f32 %v482
        %v611 = vcvt.s32.f32 %v483
        %v612 = vcvt.s32.f32 %v484
        %v613 = vcvt.s32.f32 %v485
        %v614 = vcvt.s32.f32 %v486
        %v615 = vcvt.s32.f32 %v487
        %v616 = vcvt.s32.f32 %v488
        %v617 = vcvt.s32.f32 %v489
        %v618 = vcvt.s32.f32 %v490
        %v619 = vcvt.s32.f32 %v491
        %v620 = vcvt.s32.f32 %v492
        %v621 = vcvt.s32.f32 %v493
        %v622 = vcvt.s32.f32 %v494
        %v623 = vcvt.s32.f32 %v495
        %v624 = vcvt.s32.f32 %v496
        %v625 = vcvt.s32.f32 %v497
        %v626 = vcvt.s32.f32 %v498
        %v627 = vcvt.s32.f32 %v499
        %v628 = vcvt.s32.f32 %v500
        %v629 = vcvt.s32.f32 %v501
        %v630 = vcvt.s32.f32 %v502
        %v631 = vcvt.s32.f32 %v503
        %v632 = vcvt.s32.f32 %v504
        %v633 = vcvt.s32.f32 %v505
        %v634 = vcvt.s32.f32 %v506
        %v635 = vcvt.s32.f32 %v507
        %v636 = vcvt.s32.f32 %v508
        %v637 = vcvt.s32.f32 %v509
        %v638 = vcvt.s32.f32 %v510
        %v639 = vcvt.s32.f32 %v511
        %v640 = vcvt.s32.f32 %v512
        %v641 = vcvt.s32.f32 %v513
        %v642 = vcvt.s32.f32 %v514
        %v643 = vcvt.s32.f32 %v515
        %v644 = vcvt.s32.f32 %v516
        %v645 = vcvt.s32.f32 %v517
        %v646 = vcvt.s32.f32 %v518
        %v647 = vcvt.s32.f32 %v519
        %v648 = vcvt.s32.f32 %v520
        %v649 = vcvt.s32.f32 %v521
        %v650 = vcvt.s32.f32 %v522
        %v651 = vcvt.s32.f32 %v523
        %v652 = vcvt.s32.f32 %v524
        %v653 = vcvt.s32.f32 %v525
        %v654 = vcvt.s32.f32 %v526
        %v655 = vcvt.s32.f32 %v527
        %v656 = vcvt.s32.f32 %v528
        %v657 = vcvt.s32.f32 %v529
        %v658 = vcvt.s32.f32 %v530
        %v659 = vcvt.s32.f32 %v531
        %v660 = vcvt.s32.f32 %v532
        %v661 = vcvt.s32.f32 %v533
        %v662 = vcvt.s32.f32 %v534
        %v663 = vcvt.s32.f32 %v535
        %v664 = vcvt.s32.f32 %v536
        %v665 = vcvt.s32.f32 %v537
        %v666 = vcvt.s32.f32 %v538
        %v667 = vcvt.s32.f32 %v539
        %v668 = vcvt.s32.f32 %v540
        %v669 = vcvt.s32.f32 %v541
        %v670 = vcvt.s32.f32 %v542
        %v671 = vcvt.s32.f32 %v543
        %v672 = vcvt.s32.f32 %v544
        %v673 = vcvt.s32.f32 %v545
        %v674 = vcvt.s32.f32 %v546
        %v675 = vcvt.s32.f32 %v547
        %v676 = vcvt.s32.f32 %v548
        %v677 = vcvt.s32.f32 %v549
        %v678 = vcvt.s32.f32 %v550
        %v679 = vld [vmem:[#allocation8] sm:$0xf]
        %v682 = vunpack.c.l.s4 1983009808
        %v683 = vunpack.c.0.s8 %v682
        %v684 = vlaneseq
        %v685 = vshrl.u32 %v684, 7
        %v686 = vsub.s32 %v683, %v685
        %v687 = vrot.slane %v679, %v686
        %v688 = vcombine.high %v687, %v687
        %691 = vmatprep.subr.mxu0 %v612
        %692 = vmatpush1.msra.mxu0 %v611
        %693 = vmatprep.subr.mxu0 %v608
        %694 = vmatpush1.msra.mxu0 %v607
        %695 = vmatprep.subr.mxu0 %v604
        %696 = vmatpush1.msra.mxu0 %v603
        %697 = vmatprep.subr.mxu0 %v600
        %698 = vmatpush1.msra.mxu0 %v599
        %699 = vmatprep.subr.mxu0 %v596
        %700 = vmatpush1.msra.mxu0 %v595
        %701 = vmatprep.subr.mxu0 %v592
        %702 = vmatpush1.msra.mxu0 %v591
        %703 = vmatprep.subr.mxu0 %v588
        %704 = vmatpush1.msra.mxu0 %v587
        %705 = vmatprep.subr.mxu0 %v584
        %706 = vmatpush1.msra.mxu0 %v583
        %707 = vmatprep.subr.mxu0 %v580
        %708 = vmatpush1.msra.mxu0 %v579
        %709 = vmatprep.subr.mxu0 %v576
        %710 = vmatpush1.msra.mxu0 %v575
        %711 = vmatprep.subr.mxu0 %v572
        %712 = vmatpush1.msra.mxu0 %v571
        %713 = vmatprep.subr.mxu0 %v568
        %714 = vmatpush1.msra.mxu0 %v567
        %715 = vmatprep.subr.mxu0 %v564
        %716 = vmatpush1.msra.mxu0 %v563
        %717 = vmatprep.subr.mxu0 %v560
        %718 = vmatpush1.msra.mxu0 %v559
        %719 = vmatprep.subr.mxu0 %v556
        %720 = vmatpush1.msra.mxu0 %v555
        %721 = vmatprep.subr.mxu0 %v552
        %722 = vmatpush1.msra.mxu0 %v551
        %723 = vmatprep.subr.mxu0 %v676
        %724 = vmatpush2.msra.mxu0 %v675
        %725 = vmatprep.subr.mxu0 %v672
        %726 = vmatpush2.msra.mxu0 %v671
        %727 = vmatprep.subr.mxu0 %v668
        %728 = vmatpush2.msra.mxu0 %v667
        %729 = vmatprep.subr.mxu0 %v664
        %730 = vmatpush2.msra.mxu0 %v663
        %731 = vmatprep.subr.mxu0 %v660
        %732 = vmatpush2.msra.mxu0 %v659
        %733 = vmatprep.subr.mxu0 %v656
        %734 = vmatpush2.msra.mxu0 %v655
        %735 = vmatprep.subr.mxu0 %v652
        %736 = vmatpush2.msra.mxu0 %v651
        %737 = vmatprep.subr.mxu0 %v648
        %738 = vmatpush2.msra.mxu0 %v647
        %739 = vmatprep.subr.mxu0 %v644
        %740 = vmatpush2.msra.mxu0 %v643
        %741 = vmatprep.subr.mxu0 %v640
        %742 = vmatpush2.msra.mxu0 %v639
        %743 = vmatprep.subr.mxu0 %v636
        %744 = vmatpush2.msra.mxu0 %v635
        %745 = vmatprep.subr.mxu0 %v632
        %746 = vmatpush2.msra.mxu0 %v631
        %747 = vmatprep.subr.mxu0 %v628
        %748 = vmatpush2.msra.mxu0 %v627
        %749 = vmatprep.subr.mxu0 %v624
        %750 = vmatpush2.msra.mxu0 %v623
        %751 = vmatprep.subr.mxu0 %v620
        %752 = vmatpush2.msra.mxu0 %v619
        %753 = vmatprep.subr.mxu0 %v616
        %754 = vmatpush2.msra.mxu0 %v615
        %755 = vmatprep.mubr.f32.mxu0 %v688
        %756 = vmatmul.mubr.f32.gmra.mxu0 %v687
        %v757 = vpop.f32.mrf.mxu0
        %v758 = vadd.f32 0.0, %v757
        %v759 = vpop.f32.mrf.mxu0
        %v760 = vadd.f32 0.0, %v759
        %761 = vdwg.mxu0
        %762 = vmatprep.subr.mxu0 %v614
        %763 = vmatpush1.msra.mxu0 %v613
        %764 = vmatprep.subr.mxu0 %v610
        %765 = vmatpush1.msra.mxu0 %v609
        %766 = vmatprep.subr.mxu0 %v606
        %767 = vmatpush1.msra.mxu0 %v605
        %768 = vmatprep.subr.mxu0 %v602
        %769 = vmatpush1.msra.mxu0 %v601
        %770 = vmatprep.subr.mxu0 %v598
        %771 = vmatpush1.msra.mxu0 %v597
        %772 = vmatprep.subr.mxu0 %v594
        %773 = vmatpush1.msra.mxu0 %v593
        %774 = vmatprep.subr.mxu0 %v590
        %775 = vmatpush1.msra.mxu0 %v589
        %776 = vmatprep.subr.mxu0 %v586
        %777 = vmatpush1.msra.mxu0 %v585
        %778 = vmatprep.subr.mxu0 %v582
        %779 = vmatpush1.msra.mxu0 %v581
        %780 = vmatprep.subr.mxu0 %v578
        %781 = vmatpush1.msra.mxu0 %v577
        %782 = vmatprep.subr.mxu0 %v574
        %783 = vmatpush1.msra.mxu0 %v573
        %784 = vmatprep.subr.mxu0 %v570
        %785 = vmatpush1.msra.mxu0 %v569
        %786 = vmatprep.subr.mxu0 %v566
        %787 = vmatpush1.msra.mxu0 %v565
        %788 = vmatprep.subr.mxu0 %v562
        %789 = vmatpush1.msra.mxu0 %v561
        %790 = vmatprep.subr.mxu0 %v558
        %791 = vmatpush1.msra.mxu0 %v557
        %792 = vmatprep.subr.mxu0 %v554
        %793 = vmatpush1.msra.mxu0 %v553
        %794 = vmatprep.subr.mxu0 %v678
        %795 = vmatpush2.msra.mxu0 %v677
        %796 = vmatprep.subr.mxu0 %v674
        %797 = vmatpush2.msra.mxu0 %v673
        %798 = vmatprep.subr.mxu0 %v670
        %799 = vmatpush2.msra.mxu0 %v669
        %800 = vmatprep.subr.mxu0 %v666
        %801 = vmatpush2.msra.mxu0 %v665
        %802 = vmatprep.subr.mxu0 %v662
        %803 = vmatpush2.msra.mxu0 %v661
        %804 = vmatprep.subr.mxu0 %v658
        %805 = vmatpush2.msra.mxu0 %v657
        %806 = vmatprep.subr.mxu0 %v654
        %807 = vmatpush2.msra.mxu0 %v653
        %808 = vmatprep.subr.mxu0 %v650
        %809 = vmatpush2.msra.mxu0 %v649
        %810 = vmatprep.subr.mxu0 %v646
        %811 = vmatpush2.msra.mxu0 %v645
        %812 = vmatprep.subr.mxu0 %v642
        %813 = vmatpush2.msra.mxu0 %v641
        %814 = vmatprep.subr.mxu0 %v638
        %815 = vmatpush2.msra.mxu0 %v637
        %816 = vmatprep.subr.mxu0 %v634
        %817 = vmatpush2.msra.mxu0 %v633
        %818 = vmatprep.subr.mxu0 %v630
        %819 = vmatpush2.msra.mxu0 %v629
        %820 = vmatprep.subr.mxu0 %v626
        %821 = vmatpush2.msra.mxu0 %v625
        %822 = vmatprep.subr.mxu0 %v622
        %823 = vmatpush2.msra.mxu0 %v621
        %824 = vmatprep.subr.mxu0 %v618
        %825 = vmatpush2.msra.mxu0 %v617
        %826 = vmatprep.mubr.f32.mxu0 %v688
        %827 = vmatmul.mubr.f32.gmra.mxu0 %v687
        %v828 = vpop.f32.mrf.mxu0
        %v829 = vadd.f32 0.0, %v828
        %v830 = vpop.f32.mrf.mxu0
        %v831 = vadd.f32 0.0, %v830
        %832 = vdwg.mxu0
        %v833 = vlaneseq
        %v834 = vshrl.u32 %v833, 7
        %v835 = vsub.s32 1, %v834
        %v836 = vrot.slane %v242, %v835
        %v837 = vlaneseq
        %v838 = vshrl.u32 %v837, 7
        %v839 = vsub.s32 1, %v838
        %v840 = vrot.slane %v243, %v839
        %v841 = vlaneseq
        %v842 = vshrl.u32 %v841, 7
        %v843 = vsub.s32 1, %v842
        %v844 = vrot.slane %v244, %v843
        %v845 = vlaneseq
        %v846 = vshrl.u32 %v845, 7
        %v847 = vsub.s32 1, %v846
        %v848 = vrot.slane %v245, %v847
        %vm849 = vcmp.eq.s32.totalorder %v247, %v836
        %vm850 = vcmp.eq.s32.totalorder %v247, %v840
        %vm851 = vcmp.eq.s32.totalorder %v247, %v844
        %vm852 = vcmp.eq.s32.totalorder %v247, %v848
        %vm853 = vcmp.eq.s32.totalorder %v248, %v836
        %vm854 = vcmp.eq.s32.totalorder %v248, %v840
        %vm855 = vcmp.eq.s32.totalorder %v248, %v844
        %vm856 = vcmp.eq.s32.totalorder %v248, %v848
        %vm857 = vcmp.eq.s32.totalorder %v249, %v836
        %vm858 = vcmp.eq.s32.totalorder %v249, %v840
        %vm859 = vcmp.eq.s32.totalorder %v249, %v844
        %vm860 = vcmp.eq.s32.totalorder %v249, %v848
        %vm861 = vcmp.eq.s32.totalorder %v250, %v836
        %vm862 = vcmp.eq.s32.totalorder %v250, %v840
        %vm863 = vcmp.eq.s32.totalorder %v250, %v844
        %vm864 = vcmp.eq.s32.totalorder %v250, %v848
        %vm865 = vcmp.eq.s32.totalorder %v251, %v836
        %vm866 = vcmp.eq.s32.totalorder %v251, %v840
        %vm867 = vcmp.eq.s32.totalorder %v251, %v844
        %vm868 = vcmp.eq.s32.totalorder %v251, %v848
        %vm869 = vcmp.eq.s32.totalorder %v252, %v836
        %vm870 = vcmp.eq.s32.totalorder %v252, %v840
        %vm871 = vcmp.eq.s32.totalorder %v252, %v844
        %vm872 = vcmp.eq.s32.totalorder %v252, %v848
        %vm873 = vcmp.eq.s32.totalorder %v253, %v836
        %vm874 = vcmp.eq.s32.totalorder %v253, %v840
        %vm875 = vcmp.eq.s32.totalorder %v253, %v844
        %vm876 = vcmp.eq.s32.totalorder %v253, %v848
        %vm877 = vcmp.eq.s32.totalorder %v254, %v836
        %vm878 = vcmp.eq.s32.totalorder %v254, %v840
        %vm879 = vcmp.eq.s32.totalorder %v254, %v844
        %vm880 = vcmp.eq.s32.totalorder %v254, %v848
        %vm881 = vcmp.eq.s32.totalorder %v255, %v836
        %vm882 = vcmp.eq.s32.totalorder %v255, %v840
        %vm883 = vcmp.eq.s32.totalorder %v255, %v844
        %vm884 = vcmp.eq.s32.totalorder %v255, %v848
        %vm885 = vcmp.eq.s32.totalorder %v256, %v836
        %vm886 = vcmp.eq.s32.totalorder %v256, %v840
        %vm887 = vcmp.eq.s32.totalorder %v256, %v844
        %vm888 = vcmp.eq.s32.totalorder %v256, %v848
        %vm889 = vcmp.eq.s32.totalorder %v257, %v836
        %vm890 = vcmp.eq.s32.totalorder %v257, %v840
        %vm891 = vcmp.eq.s32.totalorder %v257, %v844
        %vm892 = vcmp.eq.s32.totalorder %v257, %v848
        %vm893 = vcmp.eq.s32.totalorder %v258, %v836
        %vm894 = vcmp.eq.s32.totalorder %v258, %v840
        %vm895 = vcmp.eq.s32.totalorder %v258, %v844
        %vm896 = vcmp.eq.s32.totalorder %v258, %v848
        %vm897 = vcmp.eq.s32.totalorder %v259, %v836
        %vm898 = vcmp.eq.s32.totalorder %v259, %v840
        %vm899 = vcmp.eq.s32.totalorder %v259, %v844
        %vm900 = vcmp.eq.s32.totalorder %v259, %v848
        %vm901 = vcmp.eq.s32.totalorder %v260, %v836
        %vm902 = vcmp.eq.s32.totalorder %v260, %v840
        %vm903 = vcmp.eq.s32.totalorder %v260, %v844
        %vm904 = vcmp.eq.s32.totalorder %v260, %v848
        %vm905 = vcmp.eq.s32.totalorder %v261, %v836
        %vm906 = vcmp.eq.s32.totalorder %v261, %v840
        %vm907 = vcmp.eq.s32.totalorder %v261, %v844
        %vm908 = vcmp.eq.s32.totalorder %v261, %v848
        %vm909 = vcmp.eq.s32.totalorder %v262, %v836
        %vm910 = vcmp.eq.s32.totalorder %v262, %v840
        %vm911 = vcmp.eq.s32.totalorder %v262, %v844
        %vm912 = vcmp.eq.s32.totalorder %v262, %v848
        %vm913 = vcmp.eq.s32.totalorder %v263, %v836
        %vm914 = vcmp.eq.s32.totalorder %v263, %v840
        %vm915 = vcmp.eq.s32.totalorder %v263, %v844
        %vm916 = vcmp.eq.s32.totalorder %v263, %v848
        %vm917 = vcmp.eq.s32.totalorder %v264, %v836
        %vm918 = vcmp.eq.s32.totalorder %v264, %v840
        %vm919 = vcmp.eq.s32.totalorder %v264, %v844
        %vm920 = vcmp.eq.s32.totalorder %v264, %v848
        %vm921 = vcmp.eq.s32.totalorder %v265, %v836
        %vm922 = vcmp.eq.s32.totalorder %v265, %v840
        %vm923 = vcmp.eq.s32.totalorder %v265, %v844
        %vm924 = vcmp.eq.s32.totalorder %v265, %v848
        %vm925 = vcmp.eq.s32.totalorder %v266, %v836
        %vm926 = vcmp.eq.s32.totalorder %v266, %v840
        %vm927 = vcmp.eq.s32.totalorder %v266, %v844
        %vm928 = vcmp.eq.s32.totalorder %v266, %v848
        %vm929 = vcmp.eq.s32.totalorder %v267, %v836
        %vm930 = vcmp.eq.s32.totalorder %v267, %v840
        %vm931 = vcmp.eq.s32.totalorder %v267, %v844
        %vm932 = vcmp.eq.s32.totalorder %v267, %v848
        %vm933 = vcmp.eq.s32.totalorder %v268, %v836
        %vm934 = vcmp.eq.s32.totalorder %v268, %v840
        %vm935 = vcmp.eq.s32.totalorder %v268, %v844
        %vm936 = vcmp.eq.s32.totalorder %v268, %v848
        %vm937 = vcmp.eq.s32.totalorder %v269, %v836
        %vm938 = vcmp.eq.s32.totalorder %v269, %v840
        %vm939 = vcmp.eq.s32.totalorder %v269, %v844
        %vm940 = vcmp.eq.s32.totalorder %v269, %v848
        %vm941 = vcmp.eq.s32.totalorder %v270, %v836
        %vm942 = vcmp.eq.s32.totalorder %v270, %v840
        %vm943 = vcmp.eq.s32.totalorder %v270, %v844
        %vm944 = vcmp.eq.s32.totalorder %v270, %v848
        %vm945 = vcmp.eq.s32.totalorder %v271, %v836
        %vm946 = vcmp.eq.s32.totalorder %v271, %v840
        %vm947 = vcmp.eq.s32.totalorder %v271, %v844
        %vm948 = vcmp.eq.s32.totalorder %v271, %v848
        %vm949 = vcmp.eq.s32.totalorder %v272, %v836
        %vm950 = vcmp.eq.s32.totalorder %v272, %v840
        %vm951 = vcmp.eq.s32.totalorder %v272, %v844
        %vm952 = vcmp.eq.s32.totalorder %v272, %v848
        %vm953 = vcmp.eq.s32.totalorder %v273, %v836
        %vm954 = vcmp.eq.s32.totalorder %v273, %v840
        %vm955 = vcmp.eq.s32.totalorder %v273, %v844
        %vm956 = vcmp.eq.s32.totalorder %v273, %v848
        %vm957 = vcmp.eq.s32.totalorder %v274, %v836
        %vm958 = vcmp.eq.s32.totalorder %v274, %v840
        %vm959 = vcmp.eq.s32.totalorder %v274, %v844
        %vm960 = vcmp.eq.s32.totalorder %v274, %v848
        %vm961 = vcmp.eq.s32.totalorder %v275, %v836
        %vm962 = vcmp.eq.s32.totalorder %v275, %v840
        %vm963 = vcmp.eq.s32.totalorder %v275, %v844
        %vm964 = vcmp.eq.s32.totalorder %v275, %v848
        %vm965 = vcmp.eq.s32.totalorder %v276, %v836
        %vm966 = vcmp.eq.s32.totalorder %v276, %v840
        %vm967 = vcmp.eq.s32.totalorder %v276, %v844
        %vm968 = vcmp.eq.s32.totalorder %v276, %v848
        %vm969 = vcmp.eq.s32.totalorder %v277, %v836
        %vm970 = vcmp.eq.s32.totalorder %v277, %v840
        %vm971 = vcmp.eq.s32.totalorder %v277, %v844
        %vm972 = vcmp.eq.s32.totalorder %v277, %v848
        %vm973 = vcmp.eq.s32.totalorder %v278, %v836
        %vm974 = vcmp.eq.s32.totalorder %v278, %v840
        %vm975 = vcmp.eq.s32.totalorder %v278, %v844
        %vm976 = vcmp.eq.s32.totalorder %v278, %v848
        %v977 = vsel %vm849, 1, 0
        %v978 = vsel %vm850, 1, 0
        %v979 = vsel %vm851, 1, 0
        %v980 = vsel %vm852, 1, 0
        %v981 = vsel %vm853, 1, 0
        %v982 = vsel %vm854, 1, 0
        %v983 = vsel %vm855, 1, 0
        %v984 = vsel %vm856, 1, 0
        %v985 = vsel %vm857, 1, 0
        %v986 = vsel %vm858, 1, 0
        %v987 = vsel %vm859, 1, 0
        %v988 = vsel %vm860, 1, 0
        %v989 = vsel %vm861, 1, 0
        %v990 = vsel %vm862, 1, 0
        %v991 = vsel %vm863, 1, 0
        %v992 = vsel %vm864, 1, 0
        %v993 = vsel %vm865, 1, 0
        %v994 = vsel %vm866, 1, 0
        %v995 = vsel %vm867, 1, 0
        %v996 = vsel %vm868, 1, 0
        %v997 = vsel %vm869, 1, 0
        %v998 = vsel %vm870, 1, 0
        %v999 = vsel %vm871, 1, 0
        %v1000 = vsel %vm872, 1, 0
        %v1001 = vsel %vm873, 1, 0
        %v1002 = vsel %vm874, 1, 0
        %v1003 = vsel %vm875, 1, 0
        %v1004 = vsel %vm876, 1, 0
        %v1005 = vsel %vm877, 1, 0
        %v1006 = vsel %vm878, 1, 0
        %v1007 = vsel %vm879, 1, 0
        %v1008 = vsel %vm880, 1, 0
        %v1009 = vsel %vm881, 1, 0
        %v1010 = vsel %vm882, 1, 0
        %v1011 = vsel %vm883, 1, 0
        %v1012 = vsel %vm884, 1, 0
        %v1013 = vsel %vm885, 1, 0
        %v1014 = vsel %vm886, 1, 0
        %v1015 = vsel %vm887, 1, 0
        %v1016 = vsel %vm888, 1, 0
        %v1017 = vsel %vm889, 1, 0
        %v1018 = vsel %vm890, 1, 0
        %v1019 = vsel %vm891, 1, 0
        %v1020 = vsel %vm892, 1, 0
        %v1021 = vsel %vm893, 1, 0
        %v1022 = vsel %vm894, 1, 0
        %v1023 = vsel %vm895, 1, 0
        %v1024 = vsel %vm896, 1, 0
        %v1025 = vsel %vm897, 1, 0
        %v1026 = vsel %vm898, 1, 0
        %v1027 = vsel %vm899, 1, 0
        %v1028 = vsel %vm900, 1, 0
        %v1029 = vsel %vm901, 1, 0
        %v1030 = vsel %vm902, 1, 0
        %v1031 = vsel %vm903, 1, 0
        %v1032 = vsel %vm904, 1, 0
        %v1033 = vsel %vm905, 1, 0
        %v1034 = vsel %vm906, 1, 0
        %v1035 = vsel %vm907, 1, 0
        %v1036 = vsel %vm908, 1, 0
        %v1037 = vsel %vm909, 1, 0
        %v1038 = vsel %vm910, 1, 0
        %v1039 = vsel %vm911, 1, 0
        %v1040 = vsel %vm912, 1, 0
        %v1041 = vsel %vm913, 1, 0
        %v1042 = vsel %vm914, 1, 0
        %v1043 = vsel %vm915, 1, 0
        %v1044 = vsel %vm916, 1, 0
        %v1045 = vsel %vm917, 1, 0
        %v1046 = vsel %vm918, 1, 0
        %v1047 = vsel %vm919, 1, 0
        %v1048 = vsel %vm920, 1, 0
        %v1049 = vsel %vm921, 1, 0
        %v1050 = vsel %vm922, 1, 0
        %v1051 = vsel %vm923, 1, 0
        %v1052 = vsel %vm924, 1, 0
        %v1053 = vsel %vm925, 1, 0
        %v1054 = vsel %vm926, 1, 0
        %v1055 = vsel %vm927, 1, 0
        %v1056 = vsel %vm928, 1, 0
        %v1057 = vsel %vm929, 1, 0
        %v1058 = vsel %vm930, 1, 0
        %v1059 = vsel %vm931, 1, 0
        %v1060 = vsel %vm932, 1, 0
        %v1061 = vsel %vm933, 1, 0
        %v1062 = vsel %vm934, 1, 0
        %v1063 = vsel %vm935, 1, 0
        %v1064 = vsel %vm936, 1, 0
        %v1065 = vsel %vm937, 1, 0
        %v1066 = vsel %vm938, 1, 0
        %v1067 = vsel %vm939, 1, 0
        %v1068 = vsel %vm940, 1, 0
        %v1069 = vsel %vm941, 1, 0
        %v1070 = vsel %vm942, 1, 0
        %v1071 = vsel %vm943, 1, 0
        %v1072 = vsel %vm944, 1, 0
        %v1073 = vsel %vm945, 1, 0
        %v1074 = vsel %vm946, 1, 0
        %v1075 = vsel %vm947, 1, 0
        %v1076 = vsel %vm948, 1, 0
        %v1077 = vsel %vm949, 1, 0
        %v1078 = vsel %vm950, 1, 0
        %v1079 = vsel %vm951, 1, 0
        %v1080 = vsel %vm952, 1, 0
        %v1081 = vsel %vm953, 1, 0
        %v1082 = vsel %vm954, 1, 0
        %v1083 = vsel %vm955, 1, 0
        %v1084 = vsel %vm956, 1, 0
        %v1085 = vsel %vm957, 1, 0
        %v1086 = vsel %vm958, 1, 0
        %v1087 = vsel %vm959, 1, 0
        %v1088 = vsel %vm960, 1, 0
        %v1089 = vsel %vm961, 1, 0
        %v1090 = vsel %vm962, 1, 0
        %v1091 = vsel %vm963, 1, 0
        %v1092 = vsel %vm964, 1, 0
        %v1093 = vsel %vm965, 1, 0
        %v1094 = vsel %vm966, 1, 0
        %v1095 = vsel %vm967, 1, 0
        %v1096 = vsel %vm968, 1, 0
        %v1097 = vsel %vm969, 1, 0
        %v1098 = vsel %vm970, 1, 0
        %v1099 = vsel %vm971, 1, 0
        %v1100 = vsel %vm972, 1, 0
        %v1101 = vsel %vm973, 1, 0
        %v1102 = vsel %vm974, 1, 0
        %v1103 = vsel %vm975, 1, 0
        %v1104 = vsel %vm976, 1, 0
        %v1105 = vcvt.s32.f32 %v977
        %v1106 = vcvt.s32.f32 %v978
        %v1107 = vcvt.s32.f32 %v979
        %v1108 = vcvt.s32.f32 %v980
        %v1109 = vcvt.s32.f32 %v981
        %v1110 = vcvt.s32.f32 %v982
        %v1111 = vcvt.s32.f32 %v983
        %v1112 = vcvt.s32.f32 %v984
        %v1113 = vcvt.s32.f32 %v985
        %v1114 = vcvt.s32.f32 %v986
        %v1115 = vcvt.s32.f32 %v987
        %v1116 = vcvt.s32.f32 %v988
        %v1117 = vcvt.s32.f32 %v989
        %v1118 = vcvt.s32.f32 %v990
        %v1119 = vcvt.s32.f32 %v991
        %v1120 = vcvt.s32.f32 %v992
        %v1121 = vcvt.s32.f32 %v993
        %v1122 = vcvt.s32.f32 %v994
        %v1123 = vcvt.s32.f32 %v995
        %v1124 = vcvt.s32.f32 %v996
        %v1125 = vcvt.s32.f32 %v997
        %v1126 = vcvt.s32.f32 %v998
        %v1127 = vcvt.s32.f32 %v999
        %v1128 = vcvt.s32.f32 %v1000
        %v1129 = vcvt.s32.f32 %v1001
        %v1130 = vcvt.s32.f32 %v1002
        %v1131 = vcvt.s32.f32 %v1003
        %v1132 = vcvt.s32.f32 %v1004
        %v1133 = vcvt.s32.f32 %v1005
        %v1134 = vcvt.s32.f32 %v1006
        %v1135 = vcvt.s32.f32 %v1007
        %v1136 = vcvt.s32.f32 %v1008
        %v1137 = vcvt.s32.f32 %v1009
        %v1138 = vcvt.s32.f32 %v1010
        %v1139 = vcvt.s32.f32 %v1011
        %v1140 = vcvt.s32.f32 %v1012
        %v1141 = vcvt.s32.f32 %v1013
        %v1142 = vcvt.s32.f32 %v1014
        %v1143 = vcvt.s32.f32 %v1015
        %v1144 = vcvt.s32.f32 %v1016
        %v1145 = vcvt.s32.f32 %v1017
        %v1146 = vcvt.s32.f32 %v1018
        %v1147 = vcvt.s32.f32 %v1019
        %v1148 = vcvt.s32.f32 %v1020
        %v1149 = vcvt.s32.f32 %v1021
        %v1150 = vcvt.s32.f32 %v1022
        %v1151 = vcvt.s32.f32 %v1023
        %v1152 = vcvt.s32.f32 %v1024
        %v1153 = vcvt.s32.f32 %v1025
        %v1154 = vcvt.s32.f32 %v1026
        %v1155 = vcvt.s32.f32 %v1027
        %v1156 = vcvt.s32.f32 %v1028
        %v1157 = vcvt.s32.f32 %v1029
        %v1158 = vcvt.s32.f32 %v1030
        %v1159 = vcvt.s32.f32 %v1031
        %v1160 = vcvt.s32.f32 %v1032
        %v1161 = vcvt.s32.f32 %v1033
        %v1162 = vcvt.s32.f32 %v1034
        %v1163 = vcvt.s32.f32 %v1035
        %v1164 = vcvt.s32.f32 %v1036
        %v1165 = vcvt.s32.f32 %v1037
        %v1166 = vcvt.s32.f32 %v1038
        %v1167 = vcvt.s32.f32 %v1039
        %v1168 = vcvt.s32.f32 %v1040
        %v1169 = vcvt.s32.f32 %v1041
        %v1170 = vcvt.s32.f32 %v1042
        %v1171 = vcvt.s32.f32 %v1043
        %v1172 = vcvt.s32.f32 %v1044
        %v1173 = vcvt.s32.f32 %v1045
        %v1174 = vcvt.s32.f32 %v1046
        %v1175 = vcvt.s32.f32 %v1047
        %v1176 = vcvt.s32.f32 %v1048
        %v1177 = vcvt.s32.f32 %v1049
        %v1178 = vcvt.s32.f32 %v1050
        %v1179 = vcvt.s32.f32 %v1051
        %v1180 = vcvt.s32.f32 %v1052
        %v1181 = vcvt.s32.f32 %v1053
        %v1182 = vcvt.s32.f32 %v1054
        %v1183 = vcvt.s32.f32 %v1055
        %v1184 = vcvt.s32.f32 %v1056
        %v1185 = vcvt.s32.f32 %v1057
        %v1186 = vcvt.s32.f32 %v1058
        %v1187 = vcvt.s32.f32 %v1059
        %v1188 = vcvt.s32.f32 %v1060
        %v1189 = vcvt.s32.f32 %v1061
        %v1190 = vcvt.s32.f32 %v1062
        %v1191 = vcvt.s32.f32 %v1063
        %v1192 = vcvt.s32.f32 %v1064
        %v1193 = vcvt.s32.f32 %v1065
        %v1194 = vcvt.s32.f32 %v1066
        %v1195 = vcvt.s32.f32 %v1067
        %v1196 = vcvt.s32.f32 %v1068
        %v1197 = vcvt.s32.f32 %v1069
        %v1198 = vcvt.s32.f32 %v1070
        %v1199 = vcvt.s32.f32 %v1071
        %v1200 = vcvt.s32.f32 %v1072
        %v1201 = vcvt.s32.f32 %v1073
        %v1202 = vcvt.s32.f32 %v1074
        %v1203 = vcvt.s32.f32 %v1075
        %v1204 = vcvt.s32.f32 %v1076
        %v1205 = vcvt.s32.f32 %v1077
        %v1206 = vcvt.s32.f32 %v1078
        %v1207 = vcvt.s32.f32 %v1079
        %v1208 = vcvt.s32.f32 %v1080
        %v1209 = vcvt.s32.f32 %v1081
        %v1210 = vcvt.s32.f32 %v1082
        %v1211 = vcvt.s32.f32 %v1083
        %v1212 = vcvt.s32.f32 %v1084
        %v1213 = vcvt.s32.f32 %v1085
        %v1214 = vcvt.s32.f32 %v1086
        %v1215 = vcvt.s32.f32 %v1087
        %v1216 = vcvt.s32.f32 %v1088
        %v1217 = vcvt.s32.f32 %v1089
        %v1218 = vcvt.s32.f32 %v1090
        %v1219 = vcvt.s32.f32 %v1091
        %v1220 = vcvt.s32.f32 %v1092
        %v1221 = vcvt.s32.f32 %v1093
        %v1222 = vcvt.s32.f32 %v1094
        %v1223 = vcvt.s32.f32 %v1095
        %v1224 = vcvt.s32.f32 %v1096
        %v1225 = vcvt.s32.f32 %v1097
        %v1226 = vcvt.s32.f32 %v1098
        %v1227 = vcvt.s32.f32 %v1099
        %v1228 = vcvt.s32.f32 %v1100
        %v1229 = vcvt.s32.f32 %v1101
        %v1230 = vcvt.s32.f32 %v1102
        %v1231 = vcvt.s32.f32 %v1103
        %v1232 = vcvt.s32.f32 %v1104
        %s1233 = scalar_lea.vmem [#allocation8], 4
        %v1234 = vld [vmem:[%s1233] sm:$0xf]
        %v1237 = vunpack.c.l.s4 1983009808
        %v1238 = vunpack.c.0.s8 %v1237
        %v1239 = vlaneseq
        %v1240 = vshrl.u32 %v1239, 7
        %v1241 = vsub.s32 %v1238, %v1240
        %v1242 = vrot.slane %v1234, %v1241
        %v1243 = vcombine.high %v1242, %v1242
        %1246 = vmatprep.subr.mxu0 %v1166
        %1247 = vmatpush1.msra.mxu0 %v1165
        %1248 = vmatprep.subr.mxu0 %v1162
        %1249 = vmatpush1.msra.mxu0 %v1161
        %1250 = vmatprep.subr.mxu0 %v1158
        %1251 = vmatpush1.msra.mxu0 %v1157
        %1252 = vmatprep.subr.mxu0 %v1154
        %1253 = vmatpush1.msra.mxu0 %v1153
        %1254 = vmatprep.subr.mxu0 %v1150
        %1255 = vmatpush1.msra.mxu0 %v1149
        %1256 = vmatprep.subr.mxu0 %v1146
        %1257 = vmatpush1.msra.mxu0 %v1145
        %1258 = vmatprep.subr.mxu0 %v1142
        %1259 = vmatpush1.msra.mxu0 %v1141
        %1260 = vmatprep.subr.mxu0 %v1138
        %1261 = vmatpush1.msra.mxu0 %v1137
        %1262 = vmatprep.subr.mxu0 %v1134
        %1263 = vmatpush1.msra.mxu0 %v1133
        %1264 = vmatprep.subr.mxu0 %v1130
        %1265 = vmatpush1.msra.mxu0 %v1129
        %1266 = vmatprep.subr.mxu0 %v1126
        %1267 = vmatpush1.msra.mxu0 %v1125
        %1268 = vmatprep.subr.mxu0 %v1122
        %1269 = vmatpush1.msra.mxu0 %v1121
        %1270 = vmatprep.subr.mxu0 %v1118
        %1271 = vmatpush1.msra.mxu0 %v1117
        %1272 = vmatprep.subr.mxu0 %v1114
        %1273 = vmatpush1.msra.mxu0 %v1113
        %1274 = vmatprep.subr.mxu0 %v1110
        %1275 = vmatpush1.msra.mxu0 %v1109
        %1276 = vmatprep.subr.mxu0 %v1106
        %1277 = vmatpush1.msra.mxu0 %v1105
        %1278 = vmatprep.subr.mxu0 %v1230
        %1279 = vmatpush2.msra.mxu0 %v1229
        %1280 = vmatprep.subr.mxu0 %v1226
        %1281 = vmatpush2.msra.mxu0 %v1225
        %1282 = vmatprep.subr.mxu0 %v1222
        %1283 = vmatpush2.msra.mxu0 %v1221
        %1284 = vmatprep.subr.mxu0 %v1218
        %1285 = vmatpush2.msra.mxu0 %v1217
        %1286 = vmatprep.subr.mxu0 %v1214
        %1287 = vmatpush2.msra.mxu0 %v1213
        %1288 = vmatprep.subr.mxu0 %v1210
        %1289 = vmatpush2.msra.mxu0 %v1209
        %1290 = vmatprep.subr.mxu0 %v1206
        %1291 = vmatpush2.msra.mxu0 %v1205
        %1292 = vmatprep.subr.mxu0 %v1202
        %1293 = vmatpush2.msra.mxu0 %v1201
        %1294 = vmatprep.subr.mxu0 %v1198
        %1295 = vmatpush2.msra.mxu0 %v1197
        %1296 = vmatprep.subr.mxu0 %v1194
        %1297 = vmatpush2.msra.mxu0 %v1193
        %1298 = vmatprep.subr.mxu0 %v1190
        %1299 = vmatpush2.msra.mxu0 %v1189
        %1300 = vmatprep.subr.mxu0 %v1186
        %1301 = vmatpush2.msra.mxu0 %v1185
        %1302 = vmatprep.subr.mxu0 %v1182
        %1303 = vmatpush2.msra.mxu0 %v1181
        %1304 = vmatprep.subr.mxu0 %v1178
        %1305 = vmatpush2.msra.mxu0 %v1177
        %1306 = vmatprep.subr.mxu0 %v1174
        %1307 = vmatpush2.msra.mxu0 %v1173
        %1308 = vmatprep.subr.mxu0 %v1170
        %1309 = vmatpush2.msra.mxu0 %v1169
        %1310 = vmatprep.mubr.f32.mxu0 %v1243
        %1311 = vmatmul.mubr.f32.gmra.mxu0 %v1242
        %v1312 = vpop.f32.mrf.mxu0
        %v1313 = vadd.f32 0.0, %v1312
        %v1314 = vpop.f32.mrf.mxu0
        %v1315 = vadd.f32 0.0, %v1314
        %1316 = vdwg.mxu0
        %1317 = vmatprep.subr.mxu0 %v1168
        %1318 = vmatpush1.msra.mxu0 %v1167
        %1319 = vmatprep.subr.mxu0 %v1164
        %1320 = vmatpush1.msra.mxu0 %v1163
        %1321 = vmatprep.subr.mxu0 %v1160
        %1322 = vmatpush1.msra.mxu0 %v1159
        %1323 = vmatprep.subr.mxu0 %v1156
        %1324 = vmatpush1.msra.mxu0 %v1155
        %1325 = vmatprep.subr.mxu0 %v1152
        %1326 = vmatpush1.msra.mxu0 %v1151
        %1327 = vmatprep.subr.mxu0 %v1148
        %1328 = vmatpush1.msra.mxu0 %v1147
        %1329 = vmatprep.subr.mxu0 %v1144
        %1330 = vmatpush1.msra.mxu0 %v1143
        %1331 = vmatprep.subr.mxu0 %v1140
        %1332 = vmatpush1.msra.mxu0 %v1139
        %1333 = vmatprep.subr.mxu0 %v1136
        %1334 = vmatpush1.msra.mxu0 %v1135
        %1335 = vmatprep.subr.mxu0 %v1132
        %1336 = vmatpush1.msra.mxu0 %v1131
        %1337 = vmatprep.subr.mxu0 %v1128
        %1338 = vmatpush1.msra.mxu0 %v1127
        %1339 = vmatprep.subr.mxu0 %v1124
        %1340 = vmatpush1.msra.mxu0 %v1123
        %1341 = vmatprep.subr.mxu0 %v1120
        %1342 = vmatpush1.msra.mxu0 %v1119
        %1343 = vmatprep.subr.mxu0 %v1116
        %1344 = vmatpush1.msra.mxu0 %v1115
        %1345 = vmatprep.subr.mxu0 %v1112
        %1346 = vmatpush1.msra.mxu0 %v1111
        %1347 = vmatprep.subr.mxu0 %v1108
        %1348 = vmatpush1.msra.mxu0 %v1107
        %1349 = vmatprep.subr.mxu0 %v1232
        %1350 = vmatpush2.msra.mxu0 %v1231
        %1351 = vmatprep.subr.mxu0 %v1228
        %1352 = vmatpush2.msra.mxu0 %v1227
        %1353 = vmatprep.subr.mxu0 %v1224
        %1354 = vmatpush2.msra.mxu0 %v1223
        %1355 = vmatprep.subr.mxu0 %v1220
        %1356 = vmatpush2.msra.mxu0 %v1219
        %1357 = vmatprep.subr.mxu0 %v1216
        %1358 = vmatpush2.msra.mxu0 %v1215
        %1359 = vmatprep.subr.mxu0 %v1212
        %1360 = vmatpush2.msra.mxu0 %v1211
        %1361 = vmatprep.subr.mxu0 %v1208
        %1362 = vmatpush2.msra.mxu0 %v1207
        %1363 = vmatprep.subr.mxu0 %v1204
        %1364 = vmatpush2.msra.mxu0 %v1203
        %1365 = vmatprep.subr.mxu0 %v1200
        %1366 = vmatpush2.msra.mxu0 %v1199
        %1367 = vmatprep.subr.mxu0 %v1196
        %1368 = vmatpush2.msra.mxu0 %v1195
        %1369 = vmatprep.subr.mxu0 %v1192
        %1370 = vmatpush2.msra.mxu0 %v1191
        %1371 = vmatprep.subr.mxu0 %v1188
        %1372 = vmatpush2.msra.mxu0 %v1187
        %1373 = vmatprep.subr.mxu0 %v1184
        %1374 = vmatpush2.msra.mxu0 %v1183
        %1375 = vmatprep.subr.mxu0 %v1180
        %1376 = vmatpush2.msra.mxu0 %v1179
        %1377 = vmatprep.subr.mxu0 %v1176
        %1378 = vmatpush2.msra.mxu0 %v1175
        %1379 = vmatprep.subr.mxu0 %v1172
        %1380 = vmatpush2.msra.mxu0 %v1171
        %1381 = vmatprep.mubr.f32.mxu0 %v1243
        %1382 = vmatmul.mubr.f32.gmra.mxu0 %v1242
        %v1383 = vpop.f32.mrf.mxu0
        %v1384 = vadd.f32 0.0, %v1383
        %v1385 = vpop.f32.mrf.mxu0
        %v1386 = vadd.f32 0.0, %v1385
        %1387 = vdwg.mxu0
        %v1392 = vrot.slane %v1313, 7
        %v1393 = vrot.slane %v1315, 7
        %v1394 = vrot.slane %v1384, 7
        %v1395 = vrot.slane %v1386, 7
        %vm1400 = vcmask 1040384
        %v1401 = vsel %vm1400, %v758, %v1392
        %v1402 = vsel %vm1400, %v760, %v1393
        %v1403 = vsel %vm1400, %v829, %v1394
        %v1404 = vsel %vm1400, %v831, %v1395
        %v1409 = vrot.slane %v758, 1
        %v1410 = vrot.slane %v760, 1
        %v1411 = vrot.slane %v829, 1
        %v1412 = vrot.slane %v831, 1
        %v1417 = vsel %vm1400, %v1409, %v1313
        %v1418 = vsel %vm1400, %v1410, %v1315
        %v1419 = vsel %vm1400, %v1411, %v1384
        %v1420 = vsel %vm1400, %v1412, %v1386
        %vm1421 = vcmp.gt.f32.partialorder %v1417, 0.5
        %vm1422 = vcmp.gt.f32.partialorder %v1418, 0.5
        %vm1423 = vcmp.gt.f32.partialorder %v1419, 0.5
        %vm1424 = vcmp.gt.f32.partialorder %v1420, 0.5
        %v1425 = vsel %vm1421, 1, 0
        %v1426 = vsel %vm1422, 1, 0
        %v1427 = vsel %vm1423, 1, 0
        %v1428 = vsel %vm1424, 1, 0
        %v1429 = vcvt.s32.f32 %v1425
        %v1430 = vcvt.s32.f32 %v1426
        %v1431 = vcvt.s32.f32 %v1427
        %v1432 = vcvt.s32.f32 %v1428
        %v1437 = vcombine.low %v1401, %v1402
        %v1438 = vcombine.low %v1403, %v1404
        %v1440 = vunpack.c.l.s4 1983009808
        %v1441 = vunpack.c.0.s8 %v1440
        %v1442 = vlaneseq
        %v1443 = vshrl.u32 %v1442, 7
        %v1444 = vsub.s32 %v1441, %v1443
        %v1445 = vrot.slane %v1437, %v1444
        %v1447 = vunpack.c.l.s4 1983009808
        %v1448 = vunpack.c.0.s8 %v1447
        %v1449 = vlaneseq
        %v1450 = vshrl.u32 %v1449, 7
        %v1451 = vsub.s32 %v1448, %v1450
        %v1452 = vrot.slane %v1438, %v1451
        %v1453 = vcombine.low %v1445, %v1452
        %v1455 = vsub.f32 %v203, %v1453
        %v1456 = vand.u32 2147483647, %v1455
        %vm1457 = vcmp.lt.f32.partialorder %v1456, %v1453
        %v1458 = vcombine.low %v1425, %v1426
        %v1459 = vcombine.low %v1427, %v1428
        %v1461 = vunpack.c.l.s4 1983009808
        %v1462 = vunpack.c.0.s8 %v1461
        %v1463 = vlaneseq
        %v1464 = vshrl.u32 %v1463, 7
        %v1465 = vsub.s32 %v1462, %v1464
        %v1466 = vrot.slane %v1458, %v1465
        %v1468 = vunpack.c.l.s4 1983009808
        %v1469 = vunpack.c.0.s8 %v1468
        %v1470 = vlaneseq
        %v1471 = vshrl.u32 %v1470, 7
        %v1472 = vsub.s32 %v1469, %v1471
        %v1473 = vrot.slane %v1459, %v1472
        %v1474 = vcombine.low %v1466, %v1473
        %vm1475 = vcmp.ne.s32.totalorder %v1474, 0
        %vm1476 = vmand %vm1457, %vm1475
        %v1477 = vsel %vm1476, 1, 0
        %v1478 = vcvt.s32.f32 %v1477
        %v1479 = vand.u32 2147483647, %v1401
        %v1480 = vand.u32 2147483647, %v1402
        %v1481 = vand.u32 2147483647, %v1403
        %v1482 = vand.u32 2147483647, %v1404
        %v1487 = vcombine.low %v1479, %v1480
        %v1488 = vcombine.low %v1481, %v1482
        %v1490 = vunpack.c.l.s4 1983009808
        %v1491 = vunpack.c.0.s8 %v1490
        %v1492 = vlaneseq
        %v1493 = vshrl.u32 %v1492, 7
        %v1494 = vsub.s32 %v1491, %v1493
        %v1495 = vrot.slane %v1487, %v1494
        %v1497 = vunpack.c.l.s4 1983009808
        %v1498 = vunpack.c.0.s8 %v1497
        %v1499 = vlaneseq
        %v1500 = vshrl.u32 %v1499, 7
        %v1501 = vsub.s32 %v1498, %v1500
        %v1502 = vrot.slane %v1488, %v1501
        %v1503 = vcombine.low %v1495, %v1502
        %v1505 = vrcp.pop %v1503
        %v1506 = vmul.f32 %v1456, %v1505
        %v1507 = vsub.f32 1.0, %v1506
        %v1508 = vmul.f32 %v1507, %v1478
        %v1509 = vsub.f32 %v205, %v1508
        %v1510 = vand.u32 2147483647, %v1509
        %v1511 = vmul.f32 %v1510, %v1478
        %v1513 = vcombine.high %v1511, %v1511
        %v1515 = vunpack.c.l.s4 1983009808
        %v1516 = vunpack.c.0.s8 %v1515
        %v1517 = vlaneseq
        %v1518 = vshrl.u32 %v1517, 7
        %v1519 = vsub.s32 %v1516, %v1518
        %v1520 = vrot.slane %v1511, %v1519
        %v1522 = vunpack.c.l.s4 1983009808
        %v1523 = vunpack.c.0.s8 %v1522
        %v1524 = vlaneseq
        %v1525 = vshrl.u32 %v1524, 7
        %v1526 = vsub.s32 %v1523, %v1525
        %v1527 = vrot.slane %v1513, %v1526
        %v1528 = vcombine.high %v1520, %v1520
        %v1529 = vcombine.high %v1527, %v1527
        %v1534 = vsel %vm226, 0.0, %v1520
        %v1535 = vsel %vm227, 0.0, %v1528
        %v1536 = vsel %vm228, 0.0, %v1527
        %v1537 = vsel %vm229, 0.0, %v1529
        %v1538 = vld [vmem:[#allocation2] sm:$0xff]
        %v1543 = vcombine.low %v1429, %v1430
        %v1544 = vcombine.low %v1431, %v1432
        %v1546 = vunpack.c.l.s4 1983009808
        %v1547 = vunpack.c.0.s8 %v1546
        %v1548 = vlaneseq
        %v1549 = vshrl.u32 %v1548, 7
        %v1550 = vsub.s32 %v1547, %v1549
        %v1551 = vrot.slane %v1543, %v1550
        %v1553 = vunpack.c.l.s4 1983009808
        %v1554 = vunpack.c.0.s8 %v1553
        %v1555 = vlaneseq
        %v1556 = vshrl.u32 %v1555, 7
        %v1557 = vsub.s32 %v1554, %v1556
        %v1558 = vrot.slane %v1544, %v1557
        %v1559 = vcombine.low %v1551, %v1558
        %v1561 = vmul.f32 %v1456, %v1559
        %v1562 = vadd.f32 %v1538, %v1561
        %1563 = vst [vmem:[#allocation2] sm:$0xff] %v1562
        %v1564 = vld [vmem:[#allocation3] sm:$0xff]
        %v1565 = vadd.f32 %v1564, %v1559
        %1566 = vst [vmem:[#allocation3] sm:$0xff] %v1565
        %v1567 = vld [vmem:[#allocation4] sm:$0xff]
        %v1572 = vcombine.low %v1534, %v1535
        %v1573 = vcombine.low %v1536, %v1537
        %v1575 = vunpack.c.l.s4 1983009808
        %v1576 = vunpack.c.0.s8 %v1575
        %v1577 = vlaneseq
        %v1578 = vshrl.u32 %v1577, 7
        %v1579 = vsub.s32 %v1576, %v1578
        %v1580 = vrot.slane %v1572, %v1579
        %v1582 = vunpack.c.l.s4 1983009808
        %v1583 = vunpack.c.0.s8 %v1582
        %v1584 = vlaneseq
        %v1585 = vshrl.u32 %v1584, 7
        %v1586 = vsub.s32 %v1583, %v1585
        %v1587 = vrot.slane %v1573, %v1586
        %v1588 = vcombine.low %v1580, %v1587
        %v1590 = vadd.f32 %v1567, %v1588
        %1591 = vst [vmem:[#allocation4] sm:$0xff] %v1590
        %v1592 = vld [vmem:[#allocation5] sm:$0xff]
        %v1593 = vadd.f32 %v1592, %v1478
        %1594 = vst [vmem:[#allocation5] sm:$0xff] %v1593
        %v1595 = vld [vmem:[#allocation6] sm:$0xff]
        %v1596 = vadd.f32 %v1595, %v203
        %1597 = vst [vmem:[#allocation6] sm:$0xff] %v1596
        %v1598 = vld [vmem:[#allocation7] sm:$0xff]
        %v1599 = vadd.f32 %v1598, %v205
        %1600 = vst [vmem:[#allocation7] sm:$0xff] %v1599
        // Predicated region
        $region41: #{tpu_custom_call.1} parent=27 // pred_check
          %p1601 = pneg %p193
        $region42: #{tpu_custom_call.1} parent=27 // pred_check_branch
          %1603 = sbr.rel (%p1601) target = $region44
        $region43: #{tpu_custom_call.1} parent=27 // pred_region
          %v1604 = vld [vmem:[#allocation2] sm:$0xff]
          %v1606 = vcombine.high %v1604, %v1604
          %v1608 = vunpack.c.l.s4 1983009808
          %v1609 = vunpack.c.0.s8 %v1608
          %v1610 = vlaneseq
          %v1611 = vshrl.u32 %v1610, 7
          %v1612 = vsub.s32 %v1609, %v1611
          %v1613 = vrot.slane %v1604, %v1612
          %v1615 = vunpack.c.l.s4 1983009808
          %v1616 = vunpack.c.0.s8 %v1615
          %v1617 = vlaneseq
          %v1618 = vshrl.u32 %v1617, 7
          %v1619 = vsub.s32 %v1616, %v1618
          %v1620 = vrot.slane %v1606, %v1619
          %v1621 = vcombine.high %v1613, %v1613
          %v1622 = vcombine.high %v1620, %v1620
          %vm1627 = vcmask 1041408
          %v1628 = vsel %vm1627, %v1613, 0.0
          %v1629 = vsel %vm1627, %v1621, 0.0
          %v1630 = vadd.f32 %v1628, %v1629
          %v1631 = vsel %vm1627, %v1620, 0.0
          %v1632 = vadd.f32 %v1630, %v1631
          %v1633 = vsel %vm1627, %v1622, 0.0
          %v1634 = vadd.f32 %v1632, %v1633
          %1635 = vadd.xlane.f32.xlu0 %v1634
          %v1636 = vpop.xlane.xlu0 %1635
          %v1637 = vrot.slane %v1636, 4
          %v1638 = vadd.f32 %v1636, %v1637
          %v1639 = vrot.slane %v1638, 2
          %v1640 = vadd.f32 %v1638, %v1639
          %v1641 = vrot.slane %v1640, 1
          %v1642 = vadd.f32 %v1640, %v1641
          %s1643 = vtos %v1642
          %v1644 = vld [vmem:[#allocation3] sm:$0xff]
          %v1646 = vcombine.high %v1644, %v1644
          %v1648 = vunpack.c.l.s4 1983009808
          %v1649 = vunpack.c.0.s8 %v1648
          %v1650 = vlaneseq
          %v1651 = vshrl.u32 %v1650, 7
          %v1652 = vsub.s32 %v1649, %v1651
          %v1653 = vrot.slane %v1644, %v1652
          %v1655 = vunpack.c.l.s4 1983009808
          %v1656 = vunpack.c.0.s8 %v1655
          %v1657 = vlaneseq
          %v1658 = vshrl.u32 %v1657, 7
          %v1659 = vsub.s32 %v1656, %v1658
          %v1660 = vrot.slane %v1646, %v1659
          %v1661 = vcombine.high %v1653, %v1653
          %v1662 = vcombine.high %v1660, %v1660
          %v1667 = vsel %vm1627, %v1653, 0.0
          %v1668 = vsel %vm1627, %v1661, 0.0
          %v1669 = vadd.f32 %v1667, %v1668
          %v1670 = vsel %vm1627, %v1660, 0.0
          %v1671 = vadd.f32 %v1669, %v1670
          %v1672 = vsel %vm1627, %v1662, 0.0
          %v1673 = vadd.f32 %v1671, %v1672
          %1674 = vadd.xlane.f32.xlu0 %v1673
          %v1675 = vpop.xlane.xlu0 %1674
          %v1676 = vrot.slane %v1675, 4
          %v1677 = vadd.f32 %v1675, %v1676
          %v1678 = vrot.slane %v1677, 2
          %v1679 = vadd.f32 %v1677, %v1678
          %v1680 = vrot.slane %v1679, 1
          %v1681 = vadd.f32 %v1679, %v1680
          %s1682 = vtos %v1681
          %v1683 = vld [vmem:[#allocation4] sm:$0xff]
          %v1685 = vcombine.high %v1683, %v1683
          %v1687 = vunpack.c.l.s4 1983009808
          %v1688 = vunpack.c.0.s8 %v1687
          %v1689 = vlaneseq
          %v1690 = vshrl.u32 %v1689, 7
          %v1691 = vsub.s32 %v1688, %v1690
          %v1692 = vrot.slane %v1683, %v1691
          %v1694 = vunpack.c.l.s4 1983009808
          %v1695 = vunpack.c.0.s8 %v1694
          %v1696 = vlaneseq
          %v1697 = vshrl.u32 %v1696, 7
          %v1698 = vsub.s32 %v1695, %v1697
          %v1699 = vrot.slane %v1685, %v1698
          %v1700 = vcombine.high %v1692, %v1692
          %v1701 = vcombine.high %v1699, %v1699
          %v1706 = vsel %vm1627, %v1692, 0.0
          %v1707 = vsel %vm1627, %v1700, 0.0
          %v1708 = vadd.f32 %v1706, %v1707
          %v1709 = vsel %vm1627, %v1699, 0.0
          %v1710 = vadd.f32 %v1708, %v1709
          %v1711 = vsel %vm1627, %v1701, 0.0
          %v1712 = vadd.f32 %v1710, %v1711
          %1713 = vadd.xlane.f32.xlu0 %v1712
          %v1714 = vpop.xlane.xlu0 %1713
          %v1715 = vrot.slane %v1714, 4
          %v1716 = vadd.f32 %v1714, %v1715
          %v1717 = vrot.slane %v1716, 2
          %v1718 = vadd.f32 %v1716, %v1717
          %v1719 = vrot.slane %v1718, 1
          %v1720 = vadd.f32 %v1718, %v1719
          %s1721 = vtos %v1720
          %v1722 = vld [vmem:[#allocation5] sm:$0xff]
          %v1724 = vcombine.high %v1722, %v1722
          %v1726 = vunpack.c.l.s4 1983009808
          %v1727 = vunpack.c.0.s8 %v1726
          %v1728 = vlaneseq
          %v1729 = vshrl.u32 %v1728, 7
          %v1730 = vsub.s32 %v1727, %v1729
          %v1731 = vrot.slane %v1722, %v1730
          %v1733 = vunpack.c.l.s4 1983009808
          %v1734 = vunpack.c.0.s8 %v1733
          %v1735 = vlaneseq
          %v1736 = vshrl.u32 %v1735, 7
          %v1737 = vsub.s32 %v1734, %v1736
          %v1738 = vrot.slane %v1724, %v1737
          %v1739 = vcombine.high %v1731, %v1731
          %v1740 = vcombine.high %v1738, %v1738
          %v1745 = vsel %vm1627, %v1731, 0.0
          %v1746 = vsel %vm1627, %v1739, 0.0
          %v1747 = vadd.f32 %v1745, %v1746
          %v1748 = vsel %vm1627, %v1738, 0.0
          %v1749 = vadd.f32 %v1747, %v1748
          %v1750 = vsel %vm1627, %v1740, 0.0
          %v1751 = vadd.f32 %v1749, %v1750
          %1752 = vadd.xlane.f32.xlu0 %v1751
          %v1753 = vpop.xlane.xlu0 %1752
          %v1754 = vrot.slane %v1753, 4
          %v1755 = vadd.f32 %v1753, %v1754
          %v1756 = vrot.slane %v1755, 2
          %v1757 = vadd.f32 %v1755, %v1756
          %v1758 = vrot.slane %v1757, 1
          %v1759 = vadd.f32 %v1757, %v1758
          %s1760 = vtos %v1759
          %v1761 = vld [vmem:[#allocation6] sm:$0xff]
          %v1763 = vcombine.high %v1761, %v1761
          %v1765 = vunpack.c.l.s4 1983009808
          %v1766 = vunpack.c.0.s8 %v1765
          %v1767 = vlaneseq
          %v1768 = vshrl.u32 %v1767, 7
          %v1769 = vsub.s32 %v1766, %v1768
          %v1770 = vrot.slane %v1761, %v1769
          %v1772 = vunpack.c.l.s4 1983009808
          %v1773 = vunpack.c.0.s8 %v1772
          %v1774 = vlaneseq
          %v1775 = vshrl.u32 %v1774, 7
          %v1776 = vsub.s32 %v1773, %v1775
          %v1777 = vrot.slane %v1763, %v1776
          %v1778 = vcombine.high %v1770, %v1770
          %v1779 = vcombine.high %v1777, %v1777
          %v1784 = vsel %vm1627, %v1770, 0.0
          %v1785 = vsel %vm1627, %v1778, 0.0
          %v1786 = vadd.f32 %v1784, %v1785
          %v1787 = vsel %vm1627, %v1777, 0.0
          %v1788 = vadd.f32 %v1786, %v1787
          %v1789 = vsel %vm1627, %v1779, 0.0
          %v1790 = vadd.f32 %v1788, %v1789
          %1791 = vadd.xlane.f32.xlu0 %v1790
          %v1792 = vpop.xlane.xlu0 %1791
          %v1793 = vrot.slane %v1792, 4
          %v1794 = vadd.f32 %v1792, %v1793
          %v1795 = vrot.slane %v1794, 2
          %v1796 = vadd.f32 %v1794, %v1795
          %v1797 = vrot.slane %v1796, 1
          %v1798 = vadd.f32 %v1796, %v1797
          %s1799 = vtos %v1798
          %v1800 = vld [vmem:[#allocation7] sm:$0xff]
          %v1802 = vcombine.high %v1800, %v1800
          %v1804 = vunpack.c.l.s4 1983009808
          %v1805 = vunpack.c.0.s8 %v1804
          %v1806 = vlaneseq
          %v1807 = vshrl.u32 %v1806, 7
          %v1808 = vsub.s32 %v1805, %v1807
          %v1809 = vrot.slane %v1800, %v1808
          %v1811 = vunpack.c.l.s4 1983009808
          %v1812 = vunpack.c.0.s8 %v1811
          %v1813 = vlaneseq
          %v1814 = vshrl.u32 %v1813, 7
          %v1815 = vsub.s32 %v1812, %v1814
          %v1816 = vrot.slane %v1802, %v1815
          %v1817 = vcombine.high %v1809, %v1809
          %v1818 = vcombine.high %v1816, %v1816
          %v1823 = vsel %vm1627, %v1809, 0.0
          %v1824 = vsel %vm1627, %v1817, 0.0
          %v1825 = vadd.f32 %v1823, %v1824
          %v1826 = vsel %vm1627, %v1816, 0.0
          %v1827 = vadd.f32 %v1825, %v1826
          %v1828 = vsel %vm1627, %v1818, 0.0
          %v1829 = vadd.f32 %v1827, %v1828
          %1830 = vadd.xlane.f32.xlu0 %v1829
          %v1831 = vpop.xlane.xlu0 %1830
          %v1832 = vrot.slane %v1831, 4
          %v1833 = vadd.f32 %v1831, %v1832
          %v1834 = vrot.slane %v1833, 2
          %v1835 = vadd.f32 %v1833, %v1834
          %v1836 = vrot.slane %v1835, 1
          %v1837 = vadd.f32 %v1835, %v1836
          %s1838 = vtos %v1837
          %v1839 = vlaneseq
          %v1840 = vand.u32 %v1839, 127
          %vm1841 = vcmp.eq.s32.totalorder %v1840, 0
          %v1842 = vstv %s1643
          %v1843 = vsel %vm1841, %v1842, 0.0
          %vm1844 = vcmp.eq.s32.totalorder %v1840, 1
          %v1845 = vstv %s1682
          %v1846 = vsel %vm1844, %v1845, %v1843
          %vm1847 = vcmp.eq.s32.totalorder %v1840, 2
          %v1848 = vstv %s1721
          %v1849 = vsel %vm1847, %v1848, %v1846
          %vm1850 = vcmp.eq.s32.totalorder %v1840, 3
          %v1851 = vstv %s1760
          %v1852 = vsel %vm1850, %v1851, %v1849
          %vm1853 = vcmp.eq.s32.totalorder %v1840, 4
          %v1854 = vstv %s1799
          %v1855 = vsel %vm1853, %v1854, %v1852
          %vm1856 = vcmp.eq.s32.totalorder %v1840, 5
          %v1857 = vstv %s1838
          %v1858 = vsel %vm1856, %v1857, %v1855
          %vm1859 = vcmask 57344
          %1860 = vst.msk [vmem:[%s191] sm:$0x1] %vm1859, %v1858
        $region44: #{tpu_custom_call.1} parent=27 // pred_fallthru
          _
        %s1861 = sand.u32 %s89, 1
        %s1862 = scalar_lea.sflag [#allocation10], %s1861
        %s1863 = sand.u32 %s89, 1
        %s1864 = scalar_lea.vmem [#allocation13], %s1863
        // Predicated region
        $region45: #{tpu_custom_call.1} parent=27 // pred_check
          %p1865 = pneg %p99
        $region46: #{tpu_custom_call.1} parent=27 // pred_check_branch
          %1867 = sbr.rel (%p1865) target = $region48
        $region47: #{tpu_custom_call.1} parent=27 // pred_region
          %s1869 = ssub.s32 16, 16
          %1870 = vsyncadd %s1862, %s1869
          %s1871 = smul.addr %s24, 16
          %s1872 = scalar_lea.hbm %s2, %s1871
          %s1874 = sshll.u32 %s1864, 4
          %s1875 = int_to_ptr.vmem [resolvable:$true] %s1874
          %1877 = dma.vmem_to_hbm [thread:$0]  %s1875, 16, %s1872, %s1862
        $region48: #{tpu_custom_call.1} parent=27 // pred_fallthru
          _
      $region28: #{tpu_custom_call.1} parent=5 // pred_fallthru
        _
      %p1878 = scmp.le.s32.totalorder 2, %s15
      // Predicated region
      $region49: #{tpu_custom_call.1} parent=5 // pred_check
        %p1879 = pneg %p1878
      $region50: #{tpu_custom_call.1} parent=5 // pred_check_branch
        %1881 = sbr.rel (%p1879) target = $region52
      $region51: #{tpu_custom_call.1} parent=5 // pred_region
        %s1882 = ssub.s32 %s15, 2
        // Predicated region
        $region53: #{tpu_custom_call.1} parent=51 // pred_check
          %p1883 = pneg %p105
        $region54: #{tpu_custom_call.1} parent=51 // pred_check_branch
          %1885 = sbr.rel (%p1883) target = $region56
        $region55: #{tpu_custom_call.1} parent=51 // pred_region
          %s1886 = sand.u32 %s90, 1
          %s1887 = scalar_lea.sflag [#allocation10], %s1886
          %s1888 = sand.u32 %s90, 1
          %s1889 = scalar_lea.vmem [#allocation13], %s1888
          %1890 = dma.done %s1887, 16
        $region56: #{tpu_custom_call.1} parent=51 // pred_fallthru
          _
      $region52: #{tpu_custom_call.1} parent=5 // pred_fallthru
        _
    $region6: #{tpu_custom_call.1} parent=1 // loop_footer
      %s19 = sadd.s32 1, %s15
    $region7: #{tpu_custom_call.1} parent=1 // loop_footer_branch
      %14 = sbr.rel target = $region3
    $region8: #{tpu_custom_call.1} parent=1 // loop_exit
      _
    %1891 = vsyncpa [#allocation9], 1
    %s1892 = scalar_lea.sflag [#allocation9], 1
    %1893 = vsyncpa %s1892, 1
    %1894 = vsyncpa [#allocation12], 1
    %s1895 = scalar_lea.sflag [#allocation12], 1
    %1896 = vsyncpa %s1895, 1
    %1897 = vsyncpa [#allocation10], 1
    %s1898 = scalar_lea.sflag [#allocation10], 1
    %1899 = vsyncpa %s1898, 1

</llo_original>
